<compile_context>
chip_gen: v5e
topology: v5e:2x2
jax: 0.10.0
libtpu: 0.0.40
codegen_flags: <defaults>
</compile_context>

<pallas_src>
import math

import jax
import jax.numpy as jnp
from jax import lax
from jax.experimental import pallas as pl
from jax.experimental.pallas import tpu as pltpu


def _dot_prod_attention_kernel(x_ref, w_ref, b_ref, o_ref,
                               k_scr, q_scr, v_scr):
    # x_ref : (S, Din)        f32   (batch squeezed by BlockSpec)
    # w_ref : (Din, 3*Dout)   bf16  (pre-transposed, K part pre-scaled)
    # b_ref : (1, 3*Dout)     f32   (K part pre-scaled)
    # o_ref : (tq, Dout)
    # *_scr : (S, Dout)       bf16  VMEM scratch, persistent across the grid
    ti = pl.program_id(1)
    tq = o_ref.shape[0]
    dout = o_ref.shape[1]

    # Once per batch: fused K|Q|V projection over the full sequence.
    # One MXU matmul with N = 3*Dout amortizes the shallow Din contraction;
    # accumulation is f32, results are stored to scratch in bf16.
    @pl.when(ti == 0)
    def _():
        x = x_ref[...].astype(jnp.bfloat16)
        kqv = jnp.dot(x, w_ref[...], preferred_element_type=jnp.float32)
        kqv = kqv + b_ref[...]
        # Lane-aligned static slices (Dout is a multiple of 128) — free.
        k_scr[...] = kqv[:, :dout].astype(jnp.bfloat16)          # already scaled
        q_scr[...] = kqv[:, dout:2 * dout].astype(jnp.bfloat16)
        v_scr[...] = kqv[:, 2 * dout:].astype(jnp.bfloat16)

    # One row-tile of the score matrix: scores[i, j] = k_scaled[i,:] . q[j,:]
    start = pl.multiple_of(ti * tq, tq)
    k_tile = k_scr[pl.ds(start, tq), :]                           # (tq, Dout) bf16

    scores = lax.dot_general(
        k_tile, q_scr[...],
        dimension_numbers=(((1,), (1,)), ((), ())),               # k_tile @ q_all^T
        preferred_element_type=jnp.float32)                       # (tq, S) f32

    # Numerically stable softmax over the full row, all element-wise in f32.
    m = jnp.max(scores, axis=-1, keepdims=True)
    p = jnp.exp(scores - m)
    denom = jnp.sum(p, axis=-1, keepdims=True)

    out = jnp.dot(p.astype(jnp.bfloat16), v_scr[...],
                  preferred_element_type=jnp.float32)             # (tq, Dout) f32
    # Row normalization via EUP reciprocal + VPU multiply instead of an exact
    # divide on the epilogue critical path.
    o_ref[...] = (out * pl.reciprocal(denom, approx=True)).astype(o_ref.dtype)


def dot_prod_attention(inputs, wk, bk, wq, bq, wv, bv, *, tq=128):
    """inputs: (B, S, Din); w*: (Dout, Din); b*: (Dout,). Returns (B, S, Dout)."""
    B, S, Din = inputs.shape
    Dout = wk.shape[0]
    assert S % tq == 0, "sequence length must be a multiple of the tile size"

    inv_sqrt_depth = 1.0 / math.sqrt(Dout)

    # One-time host-side prep:
    #  - transpose nn.Linear weights so the kernel does plain x @ W,
    #  - fold 1/sqrt(depth) into the K weight and bias,
    #  - fuse the three projections into a single (Din, 3*Dout) weight (bf16
    #    MXU operand) and a single (1, 3*Dout) f32 bias.
    w_fused = jnp.concatenate(
        [wk.T * inv_sqrt_depth, wq.T, wv.T], axis=1).astype(jnp.bfloat16)
    b_fused = jnp.concatenate(
        [bk * inv_sqrt_depth, bq, bv], axis=0
    ).reshape(1, 3 * Dout).astype(jnp.float32)

    grid = (B, S // tq)

    return pl.pallas_call(
        _dot_prod_attention_kernel,
        out_shape=jax.ShapeDtypeStruct((B, S, Dout), inputs.dtype),
        grid_spec=pltpu.PrefetchScalarGridSpec(
            num_scalar_prefetch=0,
            grid=grid,
            in_specs=[
                # Full per-batch x; block index is constant across ti so it is
                # only DMA'd when the batch changes.
                pl.BlockSpec((None, S, Din), lambda b, ti: (b, 0, 0)),
                # Fused weight / bias: constant index_map -> fetched once.
                pl.BlockSpec((Din, 3 * Dout), lambda b, ti: (0, 0)),
                pl.BlockSpec((1, 3 * Dout), lambda b, ti: (0, 0)),
            ],
            out_specs=pl.BlockSpec((None, tq, Dout), lambda b, ti: (b, ti, 0)),
            scratch_shapes=[
                pltpu.VMEM((S, Dout), jnp.bfloat16),   # K (pre-scaled), full seq
                pltpu.VMEM((S, Dout), jnp.bfloat16),   # Q, full seq
                pltpu.VMEM((S, Dout), jnp.bfloat16),   # V, full seq
            ],
        ),
        compiler_params=pltpu.CompilerParams(
            # Batch shards across TensorCores on v7x; the seq-tile axis is a
            # dependent ("arbitrary") axis because of the per-batch scratch.
            dimension_semantics=("parallel", "arbitrary"),
            vmem_limit_bytes=32 * 1024 * 1024,
        ),
    )(inputs, w_fused, b_fused)


if __name__ == "__main__":
    # Small, TPU-friendly demo shapes; S > tq exercises the seq tiling.
    batch, seq, in_dim, out_dim = 2, 256, 32, 128
    tq = 128

    key = jax.random.PRNGKey(0)
    kx, kwk, kbk, kwq, kbq, kwv, kbv = jax.random.split(key, 7)

    x = jax.random.normal(kx, (batch, seq, in_dim), dtype=jnp.float32)

    # Deterministic parameter init, same scale as nn.Linear's default.
    bound = 1.0 / math.sqrt(in_dim)
    wk = jax.random.uniform(kwk, (out_dim, in_dim), jnp.float32, -bound, bound)
    bk = jax.random.uniform(kbk, (out_dim,), jnp.float32, -bound, bound)
    wq = jax.random.uniform(kwq, (out_dim, in_dim), jnp.float32, -bound, bound)
    bq = jax.random.uniform(kbq, (out_dim,), jnp.float32, -bound, bound)
    wv = jax.random.uniform(kwv, (out_dim, in_dim), jnp.float32, -bound, bound)
    bv = jax.random.uniform(kbv, (out_dim,), jnp.float32, -bound, bound)

    out = dot_prod_attention(x, wk, bk, wq, bq, wv, bv, tq=tq)
    out = jax.block_until_ready(out)

    # Pure-JAX f32 reference with the exact PyTorch forward semantics.
    k = x @ wk.T + bk
    q = x @ wq.T + bq
    v = x @ wv.T + bv
    scores = jnp.einsum("bik,bjk->bij", k, q) / math.sqrt(q.shape[2])
    probs = jax.nn.softmax(scores, axis=2)
    ref = jnp.einsum("bij,bjd->bid", probs, v)

    assert out.shape == ref.shape
    # Tolerance loosened vs the pure-f32 reference because the kernel feeds
    # the MXU bf16 operands (f32 accumulation) and uses an approx reciprocal,
    # per the performance review.
    max_err = float(jnp.max(jnp.abs(out - ref)))
    assert jnp.allclose(out, ref, atol=2e-2, rtol=2e-2), (
        f"mismatch vs reference (max abs err {max_err})")

    print("KERNEL_OK")
</pallas_src>

<mosaic_0001>
module attributes {stable_mosaic.version = 11 : i64} {
  func.func @_dot_prod_attention_kernel(%arg0: i32, %arg1: i32, %arg2: memref<1x256x32xf32, #tpu.memory_space<vmem>>, %arg3: memref<32x384xbf16, #tpu.memory_space<vmem>>, %arg4: memref<1x384xf32, #tpu.memory_space<vmem>>, %arg5: memref<1x128x128xf32, #tpu.memory_space<vmem>>, %arg6: memref<256x128xbf16, #tpu.memory_space<vmem>>, %arg7: memref<256x128xbf16, #tpu.memory_space<vmem>>, %arg8: memref<256x128xbf16, #tpu.memory_space<vmem>>) attributes {dimension_semantics = [#tpu.dimension_semantics<parallel>, #tpu.dimension_semantics<arbitrary>], iteration_bounds = array<i64: 2, 2>, scalar_prefetch = 0 : i64, scratch_operands = 3 : i64, tpu.core_type = #tpu.core_type<tc>, window_params = [{transform_indices = @transform_0, window_bounds = array<i64: 1, 256, 32>}, {pipeline_mode = #tpu.pipeline_mode<synchronous>, transform_indices = @transform_1, window_bounds = array<i64: 32, 384>}, {pipeline_mode = #tpu.pipeline_mode<synchronous>, transform_indices = @transform_2, window_bounds = array<i64: 1, 384>}, {transform_indices = @transform_3, window_bounds = array<i64: 1, 128, 128>}]} {
    %c0_i32 = arith.constant 0 : i32
    %0 = arith.cmpi eq, %arg1, %c0_i32 : i32
    %1 = arith.extui %0 : i1 to i32
    %c0_i32_0 = arith.constant 0 : i32
    %2 = arith.cmpi ne, %1, %c0_i32_0 : i32
    scf.if %2 {
      %c0_11 = arith.constant 0 : index
      %c0_12 = arith.constant 0 : index
      %c0_13 = arith.constant 0 : index
      %25 = vector.load %arg2[%c0_11, %c0_12, %c0_13] : memref<1x256x32xf32, #tpu.memory_space<vmem>>, vector<1x256x32xf32>
      %26 = vector.shape_cast %25 : vector<1x256x32xf32> to vector<256x32xf32>
      %27 = arith.truncf %26 : vector<256x32xf32> to vector<256x32xbf16>
      %c0_14 = arith.constant 0 : index
      %c0_15 = arith.constant 0 : index
      %28 = vector.load %arg3[%c0_14, %c0_15] : memref<32x384xbf16, #tpu.memory_space<vmem>>, vector<32x384xbf16>
      %cst_16 = arith.constant dense<0.000000e+00> : vector<256x384xf32>
      %29 = tpu.matmul %27, %28, %cst_16 {dimension_numbers = #tpu.dot_dimension_numbers<[1], [0], [0], [1], [0, 0, 1, 1], [], []>} : vector<256x32xbf16>, vector<32x384xbf16>, vector<256x384xf32> -> vector<256x384xf32>
      %c0_17 = arith.constant 0 : index
      %c0_18 = arith.constant 0 : index
      %30 = vector.load %arg4[%c0_17, %c0_18] : memref<1x384xf32, #tpu.memory_space<vmem>>, vector<1x384xf32>
      %31 = vector.broadcast %30 : vector<1x384xf32> to vector<256x384xf32>
      %32 = arith.addf %29, %31 : vector<256x384xf32>
      %33 = vector.extract_strided_slice %32 {offsets = [0, 0], sizes = [256, 128], strides = [1, 1]} : vector<256x384xf32> to vector<256x128xf32>
      %34 = arith.truncf %33 : vector<256x128xf32> to vector<256x128xbf16>
      %c0_19 = arith.constant 0 : index
      %c0_20 = arith.constant 0 : index
      %35 = vector.load %arg6[%c0_19, %c0_20] : memref<256x128xbf16, #tpu.memory_space<vmem>>, vector<256x128xbf16>
      tpu.vector_store %arg6[%c0_19, %c0_20], %34 {strides = array<i32>} : memref<256x128xbf16, #tpu.memory_space<vmem>>, vector<256x128xbf16>,
      %36 = vector.extract_strided_slice %32 {offsets = [0, 128], sizes = [256, 128], strides = [1, 1]} : vector<256x384xf32> to vector<256x128xf32>
      %37 = arith.truncf %36 : vector<256x128xf32> to vector<256x128xbf16>
      %c0_21 = arith.constant 0 : index
      %c0_22 = arith.constant 0 : index
      %38 = vector.load %arg7[%c0_21, %c0_22] : memref<256x128xbf16, #tpu.memory_space<vmem>>, vector<256x128xbf16>
      tpu.vector_store %arg7[%c0_21, %c0_22], %37 {strides = array<i32>} : memref<256x128xbf16, #tpu.memory_space<vmem>>, vector<256x128xbf16>,
      %39 = vector.extract_strided_slice %32 {offsets = [0, 256], sizes = [256, 128], strides = [1, 1]} : vector<256x384xf32> to vector<256x128xf32>
      %40 = arith.truncf %39 : vector<256x128xf32> to vector<256x128xbf16>
      %c0_23 = arith.constant 0 : index
      %c0_24 = arith.constant 0 : index
      %41 = vector.load %arg8[%c0_23, %c0_24] : memref<256x128xbf16, #tpu.memory_space<vmem>>, vector<256x128xbf16>
      tpu.vector_store %arg8[%c0_23, %c0_24], %40 {strides = array<i32>} : memref<256x128xbf16, #tpu.memory_space<vmem>>, vector<256x128xbf16>,
    } else {
    }
    %c128_i32 = arith.constant 128 : i32
    %3 = arith.muli %arg1, %c128_i32 : i32
    %4 = tpu.assume_multiple %3, 128 : i32
    %5 = arith.index_cast %4 : i32 to index
    %c0 = arith.constant 0 : index
    %6 = vector.load %arg6[%5, %c0] : memref<256x128xbf16, #tpu.memory_space<vmem>>, vector<128x128xbf16>
    %c0_1 = arith.constant 0 : index
    %c0_2 = arith.constant 0 : index
    %7 = vector.load %arg7[%c0_1, %c0_2] : memref<256x128xbf16, #tpu.memory_space<vmem>>, vector<256x128xbf16>
    %cst = arith.constant dense<0.000000e+00> : vector<128x256xf32>
    %8 = tpu.matmul %6, %7, %cst {dimension_numbers = #tpu.dot_dimension_numbers<[1], [1], [0], [0], [0, 0, 1, 0], [], []>} : vector<128x128xbf16>, vector<256x128xbf16>, vector<128x256xf32> -> vector<128x256xf32>
    %cst_3 = arith.constant dense<0xFF800000> : vector<128xf32>
    %9 = vector.multi_reduction <maximumf>, %8, %cst_3 [1] : vector<128x256xf32> to vector<128xf32>
    %10 = vector.shape_cast %9 : vector<128xf32> to vector<128x1xf32>
    %11 = vector.broadcast %10 : vector<128x1xf32> to vector<128x256xf32>
    %12 = arith.subf %8, %11 : vector<128x256xf32>
    %13 = math.exp %12 : vector<128x256xf32>
    %cst_4 = arith.constant dense<0.000000e+00> : vector<128xf32>
    %14 = vector.multi_reduction <add>, %13, %cst_4 [1] : vector<128x256xf32> to vector<128xf32>
    %15 = vector.shape_cast %14 : vector<128xf32> to vector<128x1xf32>
    %16 = arith.truncf %13 : vector<128x256xf32> to vector<128x256xbf16>
    %c0_5 = arith.constant 0 : index
    %c0_6 = arith.constant 0 : index
    %17 = vector.load %arg8[%c0_5, %c0_6] : memref<256x128xbf16, #tpu.memory_space<vmem>>, vector<256x128xbf16>
    %cst_7 = arith.constant dense<0.000000e+00> : vector<128x128xf32>
    %18 = tpu.matmul %16, %17, %cst_7 {dimension_numbers = #tpu.dot_dimension_numbers<[1], [0], [0], [1], [0, 0, 1, 1], [], []>} : vector<128x256xbf16>, vector<256x128xbf16>, vector<128x128xf32> -> vector<128x128xf32>
    %19 = tpu.reciprocal %15 {approx = true} : vector<128x1xf32> -> vector<128x1xf32>
    %20 = vector.broadcast %19 : vector<128x1xf32> to vector<128x128xf32>
    %21 = arith.mulf %18, %20 : vector<128x128xf32>
    %c0_8 = arith.constant 0 : index
    %c0_9 = arith.constant 0 : index
    %c0_10 = arith.constant 0 : index
    %22 = vector.load %arg5[%c0_8, %c0_9, %c0_10] : memref<1x128x128xf32, #tpu.memory_space<vmem>>, vector<1x128x128xf32>
    %23 = vector.shape_cast %22 : vector<1x128x128xf32> to vector<128x128xf32>
    %24 = vector.shape_cast %21 : vector<128x128xf32> to vector<1x128x128xf32>
    tpu.vector_store %arg5[%c0_8, %c0_9, %c0_10], %24 {strides = array<i32>} : memref<1x128x128xf32, #tpu.memory_space<vmem>>, vector<1x128x128xf32>,
    return
  }
  func.func @transform_0(%arg0: i32, %arg1: i32) -> (i32, i32, i32) {
    %c0_i32 = arith.constant 0 : i32
    %c0_i32_0 = arith.constant 0 : i32
    %c0_i32_1 = arith.constant 0 : i32
    return %arg0, %c0_i32, %c0_i32_0 : i32, i32, i32
  }
  func.func @transform_1(%arg0: i32, %arg1: i32) -> (i32, i32) {
    %c0_i32 = arith.constant 0 : i32
    %c0_i32_0 = arith.constant 0 : i32
    %c0_i32_1 = arith.constant 0 : i32
    return %c0_i32, %c0_i32_0 : i32, i32
  }
  func.func @transform_2(%arg0: i32, %arg1: i32) -> (i32, i32) {
    %c0_i32 = arith.constant 0 : i32
    %c0_i32_0 = arith.constant 0 : i32
    %c0_i32_1 = arith.constant 0 : i32
    return %c0_i32, %c0_i32_0 : i32, i32
  }
  func.func @transform_3(%arg0: i32, %arg1: i32) -> (i32, i32, i32) {
    %c0_i32 = arith.constant 0 : i32
    %c0_i32_0 = arith.constant 0 : i32
    return %arg0, %arg1, %c0_i32 : i32, i32, i32
  }
}

</mosaic_0001>

<llo_original>
// kernel: tpu_custom_call.1
$region0: #{tpu_custom_call.1}
  #allocation0 [shape = 'u32[]', space=smem, size = 0x4, offset = 0x4, fixed_abs, tag = 'smem constant byte address 0x4 - core index']
  #allocation1 [shape = 'u32[72,128]{1,0:T(1,128)}', space=vmem, size = 0x9000, scoped, tag = 'internal scratch']
  #allocation2 [shape = 'bf16[256,128]{1,0:T(8,128)(2,1)}', space=vmem, size = 0x10000, scoped, tag = 'scratch operand']
  #allocation3 [shape = 'bf16[256,128]{1,0:T(8,128)(2,1)}', space=vmem, size = 0x10000, scoped, tag = 'scratch operand']
  #allocation4 [shape = 'bf16[256,128]{1,0:T(8,128)(2,1)}', space=vmem, size = 0x10000, scoped, tag = 'scratch operand']
  %s0 = inlined_call_operand.vmem [shape: f32[2,256,32], index: 0, kind: input, shape index: {}]
  %s1 = inlined_call_operand.vmem [shape: bf16[32,384], index: 1, kind: input, shape index: {}]
  %s2 = inlined_call_operand.vmem [shape: f32[1,384], index: 2, kind: input, shape index: {}]
  %s3 = inlined_call_operand.hbm [shape: f32[2,256,128], index: 3, kind: output, shape index: {}]
  %s4 = sld [smem:[#allocation0]]
  $region49: #{tpu_custom_call.1} parent=0
    _
  %s6 = ssub.s32 1, %s4
  %s7 = scalar_select 0, %s6, %s4
  $region1: #{tpu_custom_call.1} parent=0
    #allocation5 [shape = 'u8[131072]{0}', space=vmem, size = 0x20000, scoped, tag = 'output window, operand 0']
    #allocation6 [shape = 's32[2]{0}', space=sflag, size = 0x8, scoped, tag = 'scoped memory for tpu_custom_call.1']
    %8 = vsyncpa [#allocation6], 0
    %s9 = scalar_lea.sflag [#allocation6], 1
    %10 = vsyncpa %s9, 0
    loop: start=0, step=1, limit=6
    $region2: #{tpu_custom_call.1} parent=1 // loop_pre_header
      _
    $region3: #{tpu_custom_call.1} parent=1 // loop_header
      %s12 = sphi 0, %s16
      %p13 = scmp.ge.s32.totalorder %s12, 6
      %s19 = sphi 0, %s31
      %s20 = sphi 0, %s27
      %s21 = sphi 0, %s19
      %s22 = sphi 0, %s20
      %s23 = sphi 0, %s21
      %s24 = sphi 0, %s22
      %s34 = sphi 0, %s36
      %s37 = sphi 0, %s34
      %s38 = sphi 0, %s37
      %s54 = sphi 0, %s38
      %s58 = sphi 0, %s58
      %s60 = sphi 0, %s58
      %s61 = sphi 0, %s60
      %s75 = sphi 0, %s61
      %s79 = sphi 0, %s79
      %s81 = sphi 0, %s79
      %s82 = sphi 0, %s81
      %s96 = sphi 0, %s82
      %s104 = sphi 0, %s106
      %s107 = sphi 0, %s104
      %s108 = sphi 0, %s107
      %s124 = sphi 0, %s108
    $region4: #{tpu_custom_call.1} parent=1 // loop_header_branch
      %15 = sbr.rel (%p13) target = $region8
    $region5: #{tpu_custom_call.1} parent=1 // loop_body
      %s17 = ssub.s32 %s12, 1
      %s18 = ssub.s32 %s12, 2
      %s25 = sadd.s32 1, %s20
      %p26 = scmp.ge.s32.totalorder %s25, 2
      %s27 = scalar_select %p26, 0, %s25
      %s28 = sadd.s32 1, %s19
      %s29 = scalar_select %p26, %s28, %s19
      %p30 = scmp.ge.s32.totalorder %s29, 2
      %s31 = scalar_select %p30, 0, %s29
      %s32 = ssub.s32 %s19, %s31
      %p33 = scmp.eq.s32.totalorder %s32, 0
      %s35 = sadd.s32 %s34, 1
      %s36 = scalar_select %p33, %s34, %s35
      %p39 = pneg %p33
      %p40 = scmp.eq.s32.totalorder %s12, 3
      %p41 = por %p39, %p40
      %p42 = scmp.ne.s32.totalorder %s34, %s37
      %p43 = scmp.eq.s32.totalorder %s12, 0
      %p44 = por %p42, %p43
      %p45 = scmp.ne.s32.totalorder %s34, %s37
      %p46 = scmp.eq.s32.totalorder %s17, 3
      %p47 = por %p45, %p46
      %p48 = scmp.ne.s32.totalorder %s37, %s38
      %p49 = scmp.eq.s32.totalorder %s17, 0
      %p50 = por %p48, %p49
      %p51 = scmp.ne.s32.totalorder %s37, %s38
      %p52 = scmp.eq.s32.totalorder %s18, 3
      %p53 = por %p51, %p52
      %p55 = scmp.ne.s32.totalorder %s38, %s54
      %p56 = scmp.eq.s32.totalorder %s18, 0
      %p57 = por %p55, %p56
      %s59 = sadd.s32 %s58, 1
      %p62 = scmp.eq.s32.totalorder %s12, 3
      %p63 = scmp.ne.s32.totalorder %s58, %s60
      %p64 = scmp.eq.s32.totalorder %s12, 0
      %p65 = por %p63, %p64
      %p66 = scmp.ne.s32.totalorder %s58, %s60
      %p67 = scmp.eq.s32.totalorder %s17, 3
      %p68 = por %p66, %p67
      %p69 = scmp.ne.s32.totalorder %s60, %s61
      %p70 = scmp.eq.s32.totalorder %s17, 0
      %p71 = por %p69, %p70
      %p72 = scmp.ne.s32.totalorder %s60, %s61
      %p73 = scmp.eq.s32.totalorder %s18, 3
      %p74 = por %p72, %p73
      %p76 = scmp.ne.s32.totalorder %s61, %s75
      %p77 = scmp.eq.s32.totalorder %s18, 0
      %p78 = por %p76, %p77
      %s80 = sadd.s32 %s79, 1
      %p83 = scmp.eq.s32.totalorder %s12, 3
      %p84 = scmp.ne.s32.totalorder %s79, %s81
      %p85 = scmp.eq.s32.totalorder %s12, 0
      %p86 = por %p84, %p85
      %p87 = scmp.ne.s32.totalorder %s79, %s81
      %p88 = scmp.eq.s32.totalorder %s17, 3
      %p89 = por %p87, %p88
      %p90 = scmp.ne.s32.totalorder %s81, %s82
      %p91 = scmp.eq.s32.totalorder %s17, 0
      %p92 = por %p90, %p91
      %p93 = scmp.ne.s32.totalorder %s81, %s82
      %p94 = scmp.eq.s32.totalorder %s18, 3
      %p95 = por %p93, %p94
      %p97 = scmp.ne.s32.totalorder %s82, %s96
      %p98 = scmp.eq.s32.totalorder %s18, 0
      %p99 = por %p97, %p98
      %s100 = ssub.s32 %s19, %s31
      %s101 = ssub.s32 %s20, %s27
      %s102 = sor.u32 %s100, %s101
      %p103 = scmp.eq.s32.totalorder %s102, 0
      %s105 = sadd.s32 %s104, 1
      %s106 = scalar_select %p103, %s104, %s105
      %p109 = pneg %p103
      %p110 = scmp.eq.s32.totalorder %s12, 3
      %p111 = por %p109, %p110
      %p112 = scmp.ne.s32.totalorder %s104, %s107
      %p113 = scmp.eq.s32.totalorder %s12, 0
      %p114 = por %p112, %p113
      %p115 = scmp.ne.s32.totalorder %s104, %s107
      %p116 = scmp.eq.s32.totalorder %s17, 3
      %p117 = por %p115, %p116
      %p118 = scmp.ne.s32.totalorder %s107, %s108
      %p119 = scmp.eq.s32.totalorder %s17, 0
      %p120 = por %p118, %p119
      %p121 = scmp.ne.s32.totalorder %s107, %s108
      %p122 = scmp.eq.s32.totalorder %s18, 3
      %p123 = por %p121, %p122
      %p125 = scmp.ne.s32.totalorder %s108, %s124
      %p126 = scmp.eq.s32.totalorder %s18, 0
      %p127 = por %p125, %p126
      %p128 = scmp.le.s32.totalorder 1, %s12
      %p129 = scmp.lt.s32.totalorder %s12, 5
      %p130 = pnand %p128, %p129
      %p131 = pneg %p130
      // Predicated region
      $region9: #{tpu_custom_call.1} parent=5 // pred_check
        _
      $region10: #{tpu_custom_call.1} parent=5 // pred_check_branch
        %133 = sbr.rel (%p130) target = $region12
      $region11: #{tpu_custom_call.1} parent=5 // pred_region
        %s134 = ssub.s32 %s12, 1
        // Predicated region
        $region13: #{tpu_custom_call.1} parent=11 // pred_check
          %p135 = pneg %p71
        $region14: #{tpu_custom_call.1} parent=11 // pred_check_branch
          %137 = sbr.rel (%p135) target = $region16
        $region15: #{tpu_custom_call.1} parent=11 // pred_region
          _
        $region16: #{tpu_custom_call.1} parent=11 // pred_fallthru
          _
        // Predicated region
        $region17: #{tpu_custom_call.1} parent=11 // pred_check
          %p138 = pneg %p92
        $region18: #{tpu_custom_call.1} parent=11 // pred_check_branch
          %140 = sbr.rel (%p138) target = $region20
        $region19: #{tpu_custom_call.1} parent=11 // pred_region
          _
        $region20: #{tpu_custom_call.1} parent=11 // pred_fallthru
          _
      $region12: #{tpu_custom_call.1} parent=5 // pred_fallthru
        _
      %p141 = scmp.lt.s32.totalorder %s12, 4
      // Predicated region
      $region21: #{tpu_custom_call.1} parent=5 // pred_check
        %p142 = pneg %p141
      $region22: #{tpu_custom_call.1} parent=5 // pred_check_branch
        %144 = sbr.rel (%p142) target = $region24
      $region23: #{tpu_custom_call.1} parent=5 // pred_region
        // Predicated region
        $region25: #{tpu_custom_call.1} parent=23 // pred_check
          %p145 = pneg %p44
        $region26: #{tpu_custom_call.1} parent=23 // pred_check_branch
          %147 = sbr.rel (%p145) target = $region28
        $region27: #{tpu_custom_call.1} parent=23 // pred_region
          %p148 = scmp.lt.s32.totalorder %s19, 1
          %s149 = scalar_select %p148, %s19, 1
          %s150 = smul.addr %s149, 32
          %s151 = smul.addr %s150, 8
          %s152 = scalar_lea.vmem %s0, %s151
        $region28: #{tpu_custom_call.1} parent=23 // pred_fallthru
          _
      $region24: #{tpu_custom_call.1} parent=5 // pred_fallthru
        _
      %p153 = scmp.le.s32.totalorder 1, %s12
      %p154 = scmp.lt.s32.totalorder %s12, 5
      %p155 = pnand %p153, %p154
      %p156 = pneg %p155
      // Predicated region
      $region29: #{tpu_custom_call.1} parent=5 // pred_check
        _
      $region30: #{tpu_custom_call.1} parent=5 // pred_check_branch
        %158 = sbr.rel (%p155) target = $region32
      $region31: #{tpu_custom_call.1} parent=5 // pred_region
        %s159 = ssub.s32 %s12, 1
        %p160 = scmp.lt.s32.totalorder %s21, 1
        %s161 = scalar_select %p160, %s21, 1
        %s162 = smul.addr %s161, 32
        %s163 = smul.addr %s162, 8
        %s164 = scalar_lea.vmem %s0, %s163
        %p165 = pneg %p50
        %p166 = pneg %p47
        %p167 = pneg %p71
        %p168 = pneg %p68
        %p169 = pneg %p92
        %p170 = pneg %p89
        %p171 = pneg %p120
        %p172 = pneg %p117
        %s173 = sand.u32 %s107, 1
        %s174 = scalar_lea.sflag [#allocation6], %s173
        %s175 = sand.u32 %s107, 1
        %s176 = smul.addr %s175, 128
        %s177 = scalar_lea.vmem [#allocation5], %s176
        %p178 = scmp.lt.s32.totalorder %s21, 1
        %s179 = scalar_select %p178, %s21, 1
        %s180 = smul.addr %s179, 32
        %s181 = smul.addr %s180, 8
        %s182 = scalar_lea.vmem %s0, %s181
        %s183 = smul.u32 16, %s22
        %p185 = scmp.eq.s32.totalorder %s22, 0
        // Predicated region
        $region33: #{tpu_custom_call.1} parent=31 // pred_check
          %p186 = pneg %p185
        $region34: #{tpu_custom_call.1} parent=31 // pred_check_branch
          %188 = sbr.rel (%p186) target = $region36
        $region35: #{tpu_custom_call.1} parent=31 // pred_region
          %v189 = vld [vmem:[%s182] sm:$0xff]
          %v190 = vld [vmem:[%s182 + $0x8] sm:$0xff]
          %v191 = vld [vmem:[%s182 + $0x10] sm:$0xff]
          %v192 = vld [vmem:[%s182 + $0x18] sm:$0xff]
          %v193 = vld [vmem:[%s182 + $0x20] sm:$0xff]
          %v194 = vld [vmem:[%s182 + $0x28] sm:$0xff]
          %v195 = vld [vmem:[%s182 + $0x30] sm:$0xff]
          %v196 = vld [vmem:[%s182 + $0x38] sm:$0xff]
          %v197 = vld [vmem:[%s182 + $0x40] sm:$0xff]
          %v198 = vld [vmem:[%s182 + $0x48] sm:$0xff]
          %v199 = vld [vmem:[%s182 + $0x50] sm:$0xff]
          %v200 = vld [vmem:[%s182 + $0x58] sm:$0xff]
          %v201 = vld [vmem:[%s182 + $0x60] sm:$0xff]
          %v202 = vld [vmem:[%s182 + $0x68] sm:$0xff]
          %v203 = vld [vmem:[%s182 + $0x70] sm:$0xff]
          %v204 = vld [vmem:[%s182 + $0x78] sm:$0xff]
          %v205 = vld [vmem:[%s182 + $0x80] sm:$0xff]
          %v206 = vld [vmem:[%s182 + $0x88] sm:$0xff]
          %v207 = vld [vmem:[%s182 + $0x90] sm:$0xff]
          %v208 = vld [vmem:[%s182 + $0x98] sm:$0xff]
          %v209 = vld [vmem:[%s182 + $0xa0] sm:$0xff]
          %v210 = vld [vmem:[%s182 + $0xa8] sm:$0xff]
          %v211 = vld [vmem:[%s182 + $0xb0] sm:$0xff]
          %v212 = vld [vmem:[%s182 + $0xb8] sm:$0xff]
          %v213 = vld [vmem:[%s182 + $0xc0] sm:$0xff]
          %v214 = vld [vmem:[%s182 + $0xc8] sm:$0xff]
          %v215 = vld [vmem:[%s182 + $0xd0] sm:$0xff]
          %v216 = vld [vmem:[%s182 + $0xd8] sm:$0xff]
          %v217 = vld [vmem:[%s182 + $0xe0] sm:$0xff]
          %v218 = vld [vmem:[%s182 + $0xe8] sm:$0xff]
          %v219 = vld [vmem:[%s182 + $0xf0] sm:$0xff]
          %v220 = vld [vmem:[%s182 + $0xf8] sm:$0xff]
          %v221 = vpack.c.bf16 %v190, %v189
          %v222 = vpack.c.bf16 %v192, %v191
          %v223 = vpack.c.bf16 %v194, %v193
          %v224 = vpack.c.bf16 %v196, %v195
          %v225 = vpack.c.bf16 %v198, %v197
          %v226 = vpack.c.bf16 %v200, %v199
          %v227 = vpack.c.bf16 %v202, %v201
          %v228 = vpack.c.bf16 %v204, %v203
          %v229 = vpack.c.bf16 %v206, %v205
          %v230 = vpack.c.bf16 %v208, %v207
          %v231 = vpack.c.bf16 %v210, %v209
          %v232 = vpack.c.bf16 %v212, %v211
          %v233 = vpack.c.bf16 %v214, %v213
          %v234 = vpack.c.bf16 %v216, %v215
          %v235 = vpack.c.bf16 %v218, %v217
          %v236 = vpack.c.bf16 %v220, %v219
          %v237 = vld [vmem:[%s1] sm:$0xff]
          %v238 = vld [vmem:[%s1 + $0x8] sm:$0xf]
          %v239 = vld [vmem:[%s1 + $0xc] sm:$0xff]
          %v240 = vld [vmem:[%s1 + $0x14] sm:$0xf]
          %v241 = vld [vmem:[%s1 + $0x18] sm:$0xff]
          %v242 = vld [vmem:[%s1 + $0x20] sm:$0xf]
          %v243 = vld [vmem:[%s1 + $0x24] sm:$0xff]
          %v244 = vld [vmem:[%s1 + $0x2c] sm:$0xf]
          %v245 = vld [vmem:[%s2] sm:$0x7]
          %v247 = vperm.slane %v245, 0
          %v248 = vperm.slane %v245, 1
          %v249 = vperm.slane %v245, 2
          %v261 = vunpack.c.l.b16 %v237
          %v262 = vunpack.c.h.b16 %v237
          %v263 = vunpack.c.l.b16 %v238
          %v264 = vunpack.c.l.b16 %v239
          %v265 = vunpack.c.h.b16 %v239
          %v266 = vunpack.c.l.b16 %v240
          %v267 = vunpack.c.l.b16 %v241
          %v268 = vunpack.c.h.b16 %v241
          %v269 = vunpack.c.l.b16 %v242
          %v270 = vunpack.c.l.b16 %v243
          %v271 = vunpack.c.h.b16 %v243
          %v272 = vunpack.c.l.b16 %v244
          %v273 = vpack.c.b16 %v264, %v261
          %v274 = vpack.c.b16 %v265, %v262
          %v275 = vpack.c.b16 %v266, %v263
          %v276 = vpack.c.b16 %v270, %v267
          %v277 = vpack.c.b16 %v271, %v268
          %v278 = vpack.c.b16 %v272, %v269
          %vm285 = vcmask 261120
          %v287 = vsel %vm285, %v221, 0
          %v290 = vsel %vm285, %v222, 0
          %v293 = vsel %vm285, %v223, 0
          %v296 = vsel %vm285, %v224, 0
          %v299 = vsel %vm285, %v225, 0
          %v302 = vsel %vm285, %v226, 0
          %v305 = vsel %vm285, %v227, 0
          %v308 = vsel %vm285, %v228, 0
          %v311 = vsel %vm285, %v229, 0
          %v314 = vsel %vm285, %v230, 0
          %v317 = vsel %vm285, %v231, 0
          %v320 = vsel %vm285, %v232, 0
          %v323 = vsel %vm285, %v233, 0
          %v326 = vsel %vm285, %v234, 0
          %v329 = vsel %vm285, %v235, 0
          %v332 = vsel %vm285, %v236, 0
          %334 = vmatpush.bf16.msra.mxu0 0
          %335 = vmatpush.bf16.msra.mxu0 0
          %336 = vmatpush.bf16.msra.mxu0 0
          %337 = vmatpush.bf16.msra.mxu0 0
          %338 = vmatpush.bf16.msra.mxu0 0
          %339 = vmatpush.bf16.msra.mxu0 0
          %340 = vmatpush.bf16.msra.mxu0 %v276
          %341 = vmatpush.bf16.msra.mxu0 %v273
          %342 = vmatmul.bf16.gmra.mxu0 %v287
          %v343 = vpop.f32.mrf.mxu0
          %v344 = vadd.f32 %v247, %v343
          %v345 = vpop.f32.mrf.mxu0
          %v346 = vadd.f32 %v247, %v345
          %347 = vmatmul.bf16.gmra.mxu0 %v290
          %v348 = vpop.f32.mrf.mxu0
          %v349 = vadd.f32 %v247, %v348
          %v350 = vpop.f32.mrf.mxu0
          %v351 = vadd.f32 %v247, %v350
          %352 = vmatmul.bf16.gmra.mxu0 %v293
          %v353 = vpop.f32.mrf.mxu0
          %v354 = vadd.f32 %v247, %v353
          %v355 = vpop.f32.mrf.mxu0
          %v356 = vadd.f32 %v247, %v355
          %357 = vmatmul.bf16.gmra.mxu0 %v296
          %v358 = vpop.f32.mrf.mxu0
          %v359 = vadd.f32 %v247, %v358
          %v360 = vpop.f32.mrf.mxu0
          %v361 = vadd.f32 %v247, %v360
          %362 = vmatmul.bf16.gmra.mxu0 %v299
          %v363 = vpop.f32.mrf.mxu0
          %v364 = vadd.f32 %v247, %v363
          %v365 = vpop.f32.mrf.mxu0
          %v366 = vadd.f32 %v247, %v365
          %367 = vmatmul.bf16.gmra.mxu0 %v302
          %v368 = vpop.f32.mrf.mxu0
          %v369 = vadd.f32 %v247, %v368
          %v370 = vpop.f32.mrf.mxu0
          %v371 = vadd.f32 %v247, %v370
          %372 = vmatmul.bf16.gmra.mxu0 %v305
          %v373 = vpop.f32.mrf.mxu0
          %v374 = vadd.f32 %v247, %v373
          %v375 = vpop.f32.mrf.mxu0
          %v376 = vadd.f32 %v247, %v375
          %377 = vmatmul.bf16.gmra.mxu0 %v308
          %v378 = vpop.f32.mrf.mxu0
          %v379 = vadd.f32 %v247, %v378
          %v380 = vpop.f32.mrf.mxu0
          %v381 = vadd.f32 %v247, %v380
          %382 = vmatmul.bf16.gmra.mxu0 %v311
          %v383 = vpop.f32.mrf.mxu0
          %v384 = vadd.f32 %v247, %v383
          %v385 = vpop.f32.mrf.mxu0
          %v386 = vadd.f32 %v247, %v385
          %387 = vmatmul.bf16.gmra.mxu0 %v314
          %v388 = vpop.f32.mrf.mxu0
          %v389 = vadd.f32 %v247, %v388
          %v390 = vpop.f32.mrf.mxu0
          %v391 = vadd.f32 %v247, %v390
          %392 = vmatmul.bf16.gmra.mxu0 %v317
          %v393 = vpop.f32.mrf.mxu0
          %v394 = vadd.f32 %v247, %v393
          %v395 = vpop.f32.mrf.mxu0
          %v396 = vadd.f32 %v247, %v395
          %397 = vmatmul.bf16.gmra.mxu0 %v320
          %v398 = vpop.f32.mrf.mxu0
          %v399 = vadd.f32 %v247, %v398
          %v400 = vpop.f32.mrf.mxu0
          %v401 = vadd.f32 %v247, %v400
          %402 = vmatmul.bf16.gmra.mxu0 %v323
          %v403 = vpop.f32.mrf.mxu0
          %v404 = vadd.f32 %v247, %v403
          %v405 = vpop.f32.mrf.mxu0
          %v406 = vadd.f32 %v247, %v405
          %407 = vmatmul.bf16.gmra.mxu0 %v326
          %v408 = vpop.f32.mrf.mxu0
          %v409 = vadd.f32 %v247, %v408
          %v410 = vpop.f32.mrf.mxu0
          %v411 = vadd.f32 %v247, %v410
          %412 = vmatmul.bf16.gmra.mxu0 %v329
          %v413 = vpop.f32.mrf.mxu0
          %v414 = vadd.f32 %v247, %v413
          %v415 = vpop.f32.mrf.mxu0
          %v416 = vadd.f32 %v247, %v415
          %417 = vmatmul.bf16.gmra.mxu0 %v332
          %v418 = vpop.f32.mrf.mxu0
          %v419 = vadd.f32 %v247, %v418
          %v420 = vpop.f32.mrf.mxu0
          %v421 = vadd.f32 %v247, %v420
          %422 = vdwg.mxu0
          %423 = vmatpush.bf16.msra.mxu0 0
          %424 = vmatpush.bf16.msra.mxu0 0
          %425 = vmatpush.bf16.msra.mxu0 0
          %426 = vmatpush.bf16.msra.mxu0 0
          %427 = vmatpush.bf16.msra.mxu0 0
          %428 = vmatpush.bf16.msra.mxu0 0
          %429 = vmatpush.bf16.msra.mxu0 %v277
          %430 = vmatpush.bf16.msra.mxu0 %v274
          %431 = vmatmul.bf16.gmra.mxu0 %v287
          %v432 = vpop.f32.mrf.mxu0
          %v433 = vadd.f32 %v248, %v432
          %v434 = vpop.f32.mrf.mxu0
          %v435 = vadd.f32 %v248, %v434
          %436 = vmatmul.bf16.gmra.mxu0 %v290
          %v437 = vpop.f32.mrf.mxu0
          %v438 = vadd.f32 %v248, %v437
          %v439 = vpop.f32.mrf.mxu0
          %v440 = vadd.f32 %v248, %v439
          %441 = vmatmul.bf16.gmra.mxu0 %v293
          %v442 = vpop.f32.mrf.mxu0
          %v443 = vadd.f32 %v248, %v442
          %v444 = vpop.f32.mrf.mxu0
          %v445 = vadd.f32 %v248, %v444
          %446 = vmatmul.bf16.gmra.mxu0 %v296
          %v447 = vpop.f32.mrf.mxu0
          %v448 = vadd.f32 %v248, %v447
          %v449 = vpop.f32.mrf.mxu0
          %v450 = vadd.f32 %v248, %v449
          %451 = vmatmul.bf16.gmra.mxu0 %v299
          %v452 = vpop.f32.mrf.mxu0
          %v453 = vadd.f32 %v248, %v452
          %v454 = vpop.f32.mrf.mxu0
          %v455 = vadd.f32 %v248, %v454
          %456 = vmatmul.bf16.gmra.mxu0 %v302
          %v457 = vpop.f32.mrf.mxu0
          %v458 = vadd.f32 %v248, %v457
          %v459 = vpop.f32.mrf.mxu0
          %v460 = vadd.f32 %v248, %v459
          %461 = vmatmul.bf16.gmra.mxu0 %v305
          %v462 = vpop.f32.mrf.mxu0
          %v463 = vadd.f32 %v248, %v462
          %v464 = vpop.f32.mrf.mxu0
          %v465 = vadd.f32 %v248, %v464
          %466 = vmatmul.bf16.gmra.mxu0 %v308
          %v467 = vpop.f32.mrf.mxu0
          %v468 = vadd.f32 %v248, %v467
          %v469 = vpop.f32.mrf.mxu0
          %v470 = vadd.f32 %v248, %v469
          %471 = vmatmul.bf16.gmra.mxu0 %v311
          %v472 = vpop.f32.mrf.mxu0
          %v473 = vadd.f32 %v248, %v472
          %v474 = vpop.f32.mrf.mxu0
          %v475 = vadd.f32 %v248, %v474
          %476 = vmatmul.bf16.gmra.mxu0 %v314
          %v477 = vpop.f32.mrf.mxu0
          %v478 = vadd.f32 %v248, %v477
          %v479 = vpop.f32.mrf.mxu0
          %v480 = vadd.f32 %v248, %v479
          %481 = vmatmul.bf16.gmra.mxu0 %v317
          %v482 = vpop.f32.mrf.mxu0
          %v483 = vadd.f32 %v248, %v482
          %v484 = vpop.f32.mrf.mxu0
          %v485 = vadd.f32 %v248, %v484
          %486 = vmatmul.bf16.gmra.mxu0 %v320
          %v487 = vpop.f32.mrf.mxu0
          %v488 = vadd.f32 %v248, %v487
          %v489 = vpop.f32.mrf.mxu0
          %v490 = vadd.f32 %v248, %v489
          %491 = vmatmul.bf16.gmra.mxu0 %v323
          %v492 = vpop.f32.mrf.mxu0
          %v493 = vadd.f32 %v248, %v492
          %v494 = vpop.f32.mrf.mxu0
          %v495 = vadd.f32 %v248, %v494
          %496 = vmatmul.bf16.gmra.mxu0 %v326
          %v497 = vpop.f32.mrf.mxu0
          %v498 = vadd.f32 %v248, %v497
          %v499 = vpop.f32.mrf.mxu0
          %v500 = vadd.f32 %v248, %v499
          %501 = vmatmul.bf16.gmra.mxu0 %v329
          %v502 = vpop.f32.mrf.mxu0
          %v503 = vadd.f32 %v248, %v502
          %v504 = vpop.f32.mrf.mxu0
          %v505 = vadd.f32 %v248, %v504
          %506 = vmatmul.bf16.gmra.mxu0 %v332
          %v507 = vpop.f32.mrf.mxu0
          %v508 = vadd.f32 %v248, %v507
          %v509 = vpop.f32.mrf.mxu0
          %v510 = vadd.f32 %v248, %v509
          %511 = vdwg.mxu0
          %512 = vmatpush.bf16.msra.mxu0 0
          %513 = vmatpush.bf16.msra.mxu0 0
          %514 = vmatpush.bf16.msra.mxu0 0
          %515 = vmatpush.bf16.msra.mxu0 0
          %516 = vmatpush.bf16.msra.mxu0 0
          %517 = vmatpush.bf16.msra.mxu0 0
          %518 = vmatpush.bf16.msra.mxu0 %v278
          %519 = vmatpush.bf16.msra.mxu0 %v275
          %520 = vmatmul.bf16.gmra.mxu0 %v287
          %v521 = vpop.f32.mrf.mxu0
          %v522 = vadd.f32 %v249, %v521
          %v523 = vpop.f32.mrf.mxu0
          %v524 = vadd.f32 %v249, %v523
          %525 = vmatmul.bf16.gmra.mxu0 %v290
          %v526 = vpop.f32.mrf.mxu0
          %v527 = vadd.f32 %v249, %v526
          %v528 = vpop.f32.mrf.mxu0
          %v529 = vadd.f32 %v249, %v528
          %530 = vmatmul.bf16.gmra.mxu0 %v293
          %v531 = vpop.f32.mrf.mxu0
          %v532 = vadd.f32 %v249, %v531
          %v533 = vpop.f32.mrf.mxu0
          %v534 = vadd.f32 %v249, %v533
          %535 = vmatmul.bf16.gmra.mxu0 %v296
          %v536 = vpop.f32.mrf.mxu0
          %v537 = vadd.f32 %v249, %v536
          %v538 = vpop.f32.mrf.mxu0
          %v539 = vadd.f32 %v249, %v538
          %540 = vmatmul.bf16.gmra.mxu0 %v299
          %v541 = vpop.f32.mrf.mxu0
          %v542 = vadd.f32 %v249, %v541
          %v543 = vpop.f32.mrf.mxu0
          %v544 = vadd.f32 %v249, %v543
          %545 = vmatmul.bf16.gmra.mxu0 %v302
          %v546 = vpop.f32.mrf.mxu0
          %v547 = vadd.f32 %v249, %v546
          %v548 = vpop.f32.mrf.mxu0
          %v549 = vadd.f32 %v249, %v548
          %550 = vmatmul.bf16.gmra.mxu0 %v305
          %v551 = vpop.f32.mrf.mxu0
          %v552 = vadd.f32 %v249, %v551
          %v553 = vpop.f32.mrf.mxu0
          %v554 = vadd.f32 %v249, %v553
          %555 = vmatmul.bf16.gmra.mxu0 %v308
          %v556 = vpop.f32.mrf.mxu0
          %v557 = vadd.f32 %v249, %v556
          %v558 = vpop.f32.mrf.mxu0
          %v559 = vadd.f32 %v249, %v558
          %560 = vmatmul.bf16.gmra.mxu0 %v311
          %v561 = vpop.f32.mrf.mxu0
          %v562 = vadd.f32 %v249, %v561
          %v563 = vpop.f32.mrf.mxu0
          %v564 = vadd.f32 %v249, %v563
          %565 = vmatmul.bf16.gmra.mxu0 %v314
          %v566 = vpop.f32.mrf.mxu0
          %v567 = vadd.f32 %v249, %v566
          %v568 = vpop.f32.mrf.mxu0
          %v569 = vadd.f32 %v249, %v568
          %570 = vmatmul.bf16.gmra.mxu0 %v317
          %v571 = vpop.f32.mrf.mxu0
          %v572 = vadd.f32 %v249, %v571
          %v573 = vpop.f32.mrf.mxu0
          %v574 = vadd.f32 %v249, %v573
          %575 = vmatmul.bf16.gmra.mxu0 %v320
          %v576 = vpop.f32.mrf.mxu0
          %v577 = vadd.f32 %v249, %v576
          %v578 = vpop.f32.mrf.mxu0
          %v579 = vadd.f32 %v249, %v578
          %580 = vmatmul.bf16.gmra.mxu0 %v323
          %v581 = vpop.f32.mrf.mxu0
          %v582 = vadd.f32 %v249, %v581
          %v583 = vpop.f32.mrf.mxu0
          %v584 = vadd.f32 %v249, %v583
          %585 = vmatmul.bf16.gmra.mxu0 %v326
          %v586 = vpop.f32.mrf.mxu0
          %v587 = vadd.f32 %v249, %v586
          %v588 = vpop.f32.mrf.mxu0
          %v589 = vadd.f32 %v249, %v588
          %590 = vmatmul.bf16.gmra.mxu0 %v329
          %v591 = vpop.f32.mrf.mxu0
          %v592 = vadd.f32 %v249, %v591
          %v593 = vpop.f32.mrf.mxu0
          %v594 = vadd.f32 %v249, %v593
          %595 = vmatmul.bf16.gmra.mxu0 %v332
          %v596 = vpop.f32.mrf.mxu0
          %v597 = vadd.f32 %v249, %v596
          %v598 = vpop.f32.mrf.mxu0
          %v599 = vadd.f32 %v249, %v598
          %600 = vdwg.mxu0
          %v601 = vpack.c.bf16 %v344, %v344
          %v602 = vpack.c.bf16 %v346, %v346
          %v603 = vpack.c.bf16 %v349, %v349
          %v604 = vpack.c.bf16 %v351, %v351
          %v605 = vpack.c.bf16 %v354, %v354
          %v606 = vpack.c.bf16 %v356, %v356
          %v607 = vpack.c.bf16 %v359, %v359
          %v608 = vpack.c.bf16 %v361, %v361
          %v609 = vpack.c.bf16 %v364, %v364
          %v610 = vpack.c.bf16 %v366, %v366
          %v611 = vpack.c.bf16 %v369, %v369
          %v612 = vpack.c.bf16 %v371, %v371
          %v613 = vpack.c.bf16 %v374, %v374
          %v614 = vpack.c.bf16 %v376, %v376
          %v615 = vpack.c.bf16 %v379, %v379
          %v616 = vpack.c.bf16 %v381, %v381
          %v617 = vpack.c.bf16 %v384, %v384
          %v618 = vpack.c.bf16 %v386, %v386
          %v619 = vpack.c.bf16 %v389, %v389
          %v620 = vpack.c.bf16 %v391, %v391
          %v621 = vpack.c.bf16 %v394, %v394
          %v622 = vpack.c.bf16 %v396, %v396
          %v623 = vpack.c.bf16 %v399, %v399
          %v624 = vpack.c.bf16 %v401, %v401
          %v625 = vpack.c.bf16 %v404, %v404
          %v626 = vpack.c.bf16 %v406, %v406
          %v627 = vpack.c.bf16 %v409, %v409
          %v628 = vpack.c.bf16 %v411, %v411
          %v629 = vpack.c.bf16 %v414, %v414
          %v630 = vpack.c.bf16 %v416, %v416
          %v631 = vpack.c.bf16 %v419, %v419
          %v632 = vpack.c.bf16 %v421, %v421
          %633 = vst [vmem:[#allocation2] sm:$0xf] %v601
          %634 = vst [vmem:[#allocation2 + $0x4] sm:$0xf] %v602
          %635 = vst [vmem:[#allocation2 + $0x8] sm:$0xf] %v603
          %636 = vst [vmem:[#allocation2 + $0xc] sm:$0xf] %v604
          %637 = vst [vmem:[#allocation2 + $0x10] sm:$0xf] %v605
          %638 = vst [vmem:[#allocation2 + $0x14] sm:$0xf] %v606
          %639 = vst [vmem:[#allocation2 + $0x18] sm:$0xf] %v607
          %640 = vst [vmem:[#allocation2 + $0x1c] sm:$0xf] %v608
          %641 = vst [vmem:[#allocation2 + $0x20] sm:$0xf] %v609
          %642 = vst [vmem:[#allocation2 + $0x24] sm:$0xf] %v610
          %643 = vst [vmem:[#allocation2 + $0x28] sm:$0xf] %v611
          %644 = vst [vmem:[#allocation2 + $0x2c] sm:$0xf] %v612
          %645 = vst [vmem:[#allocation2 + $0x30] sm:$0xf] %v613
          %646 = vst [vmem:[#allocation2 + $0x34] sm:$0xf] %v614
          %647 = vst [vmem:[#allocation2 + $0x38] sm:$0xf] %v615
          %648 = vst [vmem:[#allocation2 + $0x3c] sm:$0xf] %v616
          %649 = vst [vmem:[#allocation2 + $0x40] sm:$0xf] %v617
          %650 = vst [vmem:[#allocation2 + $0x44] sm:$0xf] %v618
          %651 = vst [vmem:[#allocation2 + $0x48] sm:$0xf] %v619
          %652 = vst [vmem:[#allocation2 + $0x4c] sm:$0xf] %v620
          %653 = vst [vmem:[#allocation2 + $0x50] sm:$0xf] %v621
          %654 = vst [vmem:[#allocation2 + $0x54] sm:$0xf] %v622
          %655 = vst [vmem:[#allocation2 + $0x58] sm:$0xf] %v623
          %656 = vst [vmem:[#allocation2 + $0x5c] sm:$0xf] %v624
          %657 = vst [vmem:[#allocation2 + $0x60] sm:$0xf] %v625
          %658 = vst [vmem:[#allocation2 + $0x64] sm:$0xf] %v626
          %659 = vst [vmem:[#allocation2 + $0x68] sm:$0xf] %v627
          %660 = vst [vmem:[#allocation2 + $0x6c] sm:$0xf] %v628
          %661 = vst [vmem:[#allocation2 + $0x70] sm:$0xf] %v629
          %662 = vst [vmem:[#allocation2 + $0x74] sm:$0xf] %v630
          %663 = vst [vmem:[#allocation2 + $0x78] sm:$0xf] %v631
          %664 = vst [vmem:[#allocation2 + $0x7c] sm:$0xf] %v632
          %v665 = vpack.c.bf16 %v433, %v433
          %v666 = vpack.c.bf16 %v435, %v435
          %v667 = vpack.c.bf16 %v438, %v438
          %v668 = vpack.c.bf16 %v440, %v440
          %v669 = vpack.c.bf16 %v443, %v443
          %v670 = vpack.c.bf16 %v445, %v445
          %v671 = vpack.c.bf16 %v448, %v448
          %v672 = vpack.c.bf16 %v450, %v450
          %v673 = vpack.c.bf16 %v453, %v453
          %v674 = vpack.c.bf16 %v455, %v455
          %v675 = vpack.c.bf16 %v458, %v458
          %v676 = vpack.c.bf16 %v460, %v460
          %v677 = vpack.c.bf16 %v463, %v463
          %v678 = vpack.c.bf16 %v465, %v465
          %v679 = vpack.c.bf16 %v468, %v468
          %v680 = vpack.c.bf16 %v470, %v470
          %v681 = vpack.c.bf16 %v473, %v473
          %v682 = vpack.c.bf16 %v475, %v475
          %v683 = vpack.c.bf16 %v478, %v478
          %v684 = vpack.c.bf16 %v480, %v480
          %v685 = vpack.c.bf16 %v483, %v483
          %v686 = vpack.c.bf16 %v485, %v485
          %v687 = vpack.c.bf16 %v488, %v488
          %v688 = vpack.c.bf16 %v490, %v490
          %v689 = vpack.c.bf16 %v493, %v493
          %v690 = vpack.c.bf16 %v495, %v495
          %v691 = vpack.c.bf16 %v498, %v498
          %v692 = vpack.c.bf16 %v500, %v500
          %v693 = vpack.c.bf16 %v503, %v503
          %v694 = vpack.c.bf16 %v505, %v505
          %v695 = vpack.c.bf16 %v508, %v508
          %v696 = vpack.c.bf16 %v510, %v510
          %697 = vst [vmem:[#allocation3] sm:$0xf] %v665
          %698 = vst [vmem:[#allocation3 + $0x4] sm:$0xf] %v666
          %699 = vst [vmem:[#allocation3 + $0x8] sm:$0xf] %v667
          %700 = vst [vmem:[#allocation3 + $0xc] sm:$0xf] %v668
          %701 = vst [vmem:[#allocation3 + $0x10] sm:$0xf] %v669
          %702 = vst [vmem:[#allocation3 + $0x14] sm:$0xf] %v670
          %703 = vst [vmem:[#allocation3 + $0x18] sm:$0xf] %v671
          %704 = vst [vmem:[#allocation3 + $0x1c] sm:$0xf] %v672
          %705 = vst [vmem:[#allocation3 + $0x20] sm:$0xf] %v673
          %706 = vst [vmem:[#allocation3 + $0x24] sm:$0xf] %v674
          %707 = vst [vmem:[#allocation3 + $0x28] sm:$0xf] %v675
          %708 = vst [vmem:[#allocation3 + $0x2c] sm:$0xf] %v676
          %709 = vst [vmem:[#allocation3 + $0x30] sm:$0xf] %v677
          %710 = vst [vmem:[#allocation3 + $0x34] sm:$0xf] %v678
          %711 = vst [vmem:[#allocation3 + $0x38] sm:$0xf] %v679
          %712 = vst [vmem:[#allocation3 + $0x3c] sm:$0xf] %v680
          %713 = vst [vmem:[#allocation3 + $0x40] sm:$0xf] %v681
          %714 = vst [vmem:[#allocation3 + $0x44] sm:$0xf] %v682
          %715 = vst [vmem:[#allocation3 + $0x48] sm:$0xf] %v683
          %716 = vst [vmem:[#allocation3 + $0x4c] sm:$0xf] %v684
          %717 = vst [vmem:[#allocation3 + $0x50] sm:$0xf] %v685
          %718 = vst [vmem:[#allocation3 + $0x54] sm:$0xf] %v686
          %719 = vst [vmem:[#allocation3 + $0x58] sm:$0xf] %v687
          %720 = vst [vmem:[#allocation3 + $0x5c] sm:$0xf] %v688
          %721 = vst [vmem:[#allocation3 + $0x60] sm:$0xf] %v689
          %722 = vst [vmem:[#allocation3 + $0x64] sm:$0xf] %v690
          %723 = vst [vmem:[#allocation3 + $0x68] sm:$0xf] %v691
          %724 = vst [vmem:[#allocation3 + $0x6c] sm:$0xf] %v692
          %725 = vst [vmem:[#allocation3 + $0x70] sm:$0xf] %v693
          %726 = vst [vmem:[#allocation3 + $0x74] sm:$0xf] %v694
          %727 = vst [vmem:[#allocation3 + $0x78] sm:$0xf] %v695
          %728 = vst [vmem:[#allocation3 + $0x7c] sm:$0xf] %v696
          %v729 = vpack.c.bf16 %v522, %v522
          %v730 = vpack.c.bf16 %v524, %v524
          %v731 = vpack.c.bf16 %v527, %v527
          %v732 = vpack.c.bf16 %v529, %v529
          %v733 = vpack.c.bf16 %v532, %v532
          %v734 = vpack.c.bf16 %v534, %v534
          %v735 = vpack.c.bf16 %v537, %v537
          %v736 = vpack.c.bf16 %v539, %v539
          %v737 = vpack.c.bf16 %v542, %v542
          %v738 = vpack.c.bf16 %v544, %v544
          %v739 = vpack.c.bf16 %v547, %v547
          %v740 = vpack.c.bf16 %v549, %v549
          %v741 = vpack.c.bf16 %v552, %v552
          %v742 = vpack.c.bf16 %v554, %v554
          %v743 = vpack.c.bf16 %v557, %v557
          %v744 = vpack.c.bf16 %v559, %v559
          %v745 = vpack.c.bf16 %v562, %v562
          %v746 = vpack.c.bf16 %v564, %v564
          %v747 = vpack.c.bf16 %v567, %v567
          %v748 = vpack.c.bf16 %v569, %v569
          %v749 = vpack.c.bf16 %v572, %v572
          %v750 = vpack.c.bf16 %v574, %v574
          %v751 = vpack.c.bf16 %v577, %v577
          %v752 = vpack.c.bf16 %v579, %v579
          %v753 = vpack.c.bf16 %v582, %v582
          %v754 = vpack.c.bf16 %v584, %v584
          %v755 = vpack.c.bf16 %v587, %v587
          %v756 = vpack.c.bf16 %v589, %v589
          %v757 = vpack.c.bf16 %v592, %v592
          %v758 = vpack.c.bf16 %v594, %v594
          %v759 = vpack.c.bf16 %v597, %v597
          %v760 = vpack.c.bf16 %v599, %v599
          %761 = vst [vmem:[#allocation4] sm:$0xf] %v729
          %762 = vst [vmem:[#allocation4 + $0x4] sm:$0xf] %v730
          %763 = vst [vmem:[#allocation4 + $0x8] sm:$0xf] %v731
          %764 = vst [vmem:[#allocation4 + $0xc] sm:$0xf] %v732
          %765 = vst [vmem:[#allocation4 + $0x10] sm:$0xf] %v733
          %766 = vst [vmem:[#allocation4 + $0x14] sm:$0xf] %v734
          %767 = vst [vmem:[#allocation4 + $0x18] sm:$0xf] %v735
          %768 = vst [vmem:[#allocation4 + $0x1c] sm:$0xf] %v736
          %769 = vst [vmem:[#allocation4 + $0x20] sm:$0xf] %v737
          %770 = vst [vmem:[#allocation4 + $0x24] sm:$0xf] %v738
          %771 = vst [vmem:[#allocation4 + $0x28] sm:$0xf] %v739
          %772 = vst [vmem:[#allocation4 + $0x2c] sm:$0xf] %v740
          %773 = vst [vmem:[#allocation4 + $0x30] sm:$0xf] %v741
          %774 = vst [vmem:[#allocation4 + $0x34] sm:$0xf] %v742
          %775 = vst [vmem:[#allocation4 + $0x38] sm:$0xf] %v743
          %776 = vst [vmem:[#allocation4 + $0x3c] sm:$0xf] %v744
          %777 = vst [vmem:[#allocation4 + $0x40] sm:$0xf] %v745
          %778 = vst [vmem:[#allocation4 + $0x44] sm:$0xf] %v746
          %779 = vst [vmem:[#allocation4 + $0x48] sm:$0xf] %v747
          %780 = vst [vmem:[#allocation4 + $0x4c] sm:$0xf] %v748
          %781 = vst [vmem:[#allocation4 + $0x50] sm:$0xf] %v749
          %782 = vst [vmem:[#allocation4 + $0x54] sm:$0xf] %v750
          %783 = vst [vmem:[#allocation4 + $0x58] sm:$0xf] %v751
          %784 = vst [vmem:[#allocation4 + $0x5c] sm:$0xf] %v752
          %785 = vst [vmem:[#allocation4 + $0x60] sm:$0xf] %v753
          %786 = vst [vmem:[#allocation4 + $0x64] sm:$0xf] %v754
          %787 = vst [vmem:[#allocation4 + $0x68] sm:$0xf] %v755
          %788 = vst [vmem:[#allocation4 + $0x6c] sm:$0xf] %v756
          %789 = vst [vmem:[#allocation4 + $0x70] sm:$0xf] %v757
          %790 = vst [vmem:[#allocation4 + $0x74] sm:$0xf] %v758
          %791 = vst [vmem:[#allocation4 + $0x78] sm:$0xf] %v759
          %792 = vst [vmem:[#allocation4 + $0x7c] sm:$0xf] %v760
        $region36: #{tpu_custom_call.1} parent=31 // pred_fallthru
          _
        %s793 = smul.u32 %s22, 128
        %s794 = sshra.s32 %s793, 3
        %s795 = sand.u32 %s793, 7
        %s796 = smul.addr %s794, 4
        %s797 = scalar_lea.vmem [#allocation2], %s796
        %v798 = vld [vmem:[%s797] sm:$0xf]
        %v799 = vld [vmem:[%s797 + $0x4] sm:$0xf]
        %v800 = vld [vmem:[%s797 + $0x8] sm:$0xf]
        %v801 = vld [vmem:[%s797 + $0xc] sm:$0xf]
        %v802 = vld [vmem:[%s797 + $0x10] sm:$0xf]
        %v803 = vld [vmem:[%s797 + $0x14] sm:$0xf]
        %v804 = vld [vmem:[%s797 + $0x18] sm:$0xf]
        %v805 = vld [vmem:[%s797 + $0x1c] sm:$0xf]
        %v806 = vld [vmem:[%s797 + $0x20] sm:$0xf]
        %v807 = vld [vmem:[%s797 + $0x24] sm:$0xf]
        %v808 = vld [vmem:[%s797 + $0x28] sm:$0xf]
        %v809 = vld [vmem:[%s797 + $0x2c] sm:$0xf]
        %v810 = vld [vmem:[%s797 + $0x30] sm:$0xf]
        %v811 = vld [vmem:[%s797 + $0x34] sm:$0xf]
        %v812 = vld [vmem:[%s797 + $0x38] sm:$0xf]
        %v813 = vld [vmem:[%s797 + $0x3c] sm:$0xf]
        %v814 = vld [vmem:[#allocation3] sm:$0xf]
        %v815 = vld [vmem:[#allocation3 + $0x4] sm:$0xf]
        %v816 = vld [vmem:[#allocation3 + $0x8] sm:$0xf]
        %v817 = vld [vmem:[#allocation3 + $0xc] sm:$0xf]
        %v818 = vld [vmem:[#allocation3 + $0x10] sm:$0xf]
        %v819 = vld [vmem:[#allocation3 + $0x14] sm:$0xf]
        %v820 = vld [vmem:[#allocation3 + $0x18] sm:$0xf]
        %v821 = vld [vmem:[#allocation3 + $0x1c] sm:$0xf]
        %v822 = vld [vmem:[#allocation3 + $0x20] sm:$0xf]
        %v823 = vld [vmem:[#allocation3 + $0x24] sm:$0xf]
        %v824 = vld [vmem:[#allocation3 + $0x28] sm:$0xf]
        %v825 = vld [vmem:[#allocation3 + $0x2c] sm:$0xf]
        %v826 = vld [vmem:[#allocation3 + $0x30] sm:$0xf]
        %v827 = vld [vmem:[#allocation3 + $0x34] sm:$0xf]
        %v828 = vld [vmem:[#allocation3 + $0x38] sm:$0xf]
        %v829 = vld [vmem:[#allocation3 + $0x3c] sm:$0xf]
        %v830 = vld [vmem:[#allocation3 + $0x40] sm:$0xf]
        %v831 = vld [vmem:[#allocation3 + $0x44] sm:$0xf]
        %v832 = vld [vmem:[#allocation3 + $0x48] sm:$0xf]
        %v833 = vld [vmem:[#allocation3 + $0x4c] sm:$0xf]
        %v834 = vld [vmem:[#allocation3 + $0x50] sm:$0xf]
        %v835 = vld [vmem:[#allocation3 + $0x54] sm:$0xf]
        %v836 = vld [vmem:[#allocation3 + $0x58] sm:$0xf]
        %v837 = vld [vmem:[#allocation3 + $0x5c] sm:$0xf]
        %v838 = vld [vmem:[#allocation3 + $0x60] sm:$0xf]
        %v839 = vld [vmem:[#allocation3 + $0x64] sm:$0xf]
        %v840 = vld [vmem:[#allocation3 + $0x68] sm:$0xf]
        %v841 = vld [vmem:[#allocation3 + $0x6c] sm:$0xf]
        %v842 = vld [vmem:[#allocation3 + $0x70] sm:$0xf]
        %v843 = vld [vmem:[#allocation3 + $0x74] sm:$0xf]
        %v844 = vld [vmem:[#allocation3 + $0x78] sm:$0xf]
        %v845 = vld [vmem:[#allocation3 + $0x7c] sm:$0xf]
        %v862 = vunpack.c.l.b16 %v798
        %v863 = vunpack.c.l.b16 %v799
        %v864 = vunpack.c.l.b16 %v800
        %v865 = vunpack.c.l.b16 %v801
        %v866 = vunpack.c.l.b16 %v802
        %v867 = vunpack.c.l.b16 %v803
        %v868 = vunpack.c.l.b16 %v804
        %v869 = vunpack.c.l.b16 %v805
        %v870 = vunpack.c.l.b16 %v806
        %v871 = vunpack.c.l.b16 %v807
        %v872 = vunpack.c.l.b16 %v808
        %v873 = vunpack.c.l.b16 %v809
        %v874 = vunpack.c.l.b16 %v810
        %v875 = vunpack.c.l.b16 %v811
        %v876 = vunpack.c.l.b16 %v812
        %v877 = vunpack.c.l.b16 %v813
        %v878 = vpack.c.b16 %v863, %v862
        %v879 = vpack.c.b16 %v865, %v864
        %v880 = vpack.c.b16 %v867, %v866
        %v881 = vpack.c.b16 %v869, %v868
        %v882 = vpack.c.b16 %v871, %v870
        %v883 = vpack.c.b16 %v873, %v872
        %v884 = vpack.c.b16 %v875, %v874
        %v885 = vpack.c.b16 %v877, %v876
        %v926 = vunpack.c.l.b16 %v814
        %v927 = vunpack.c.l.b16 %v815
        %v928 = vunpack.c.l.b16 %v816
        %v929 = vunpack.c.l.b16 %v817
        %v930 = vunpack.c.l.b16 %v818
        %v931 = vunpack.c.l.b16 %v819
        %v932 = vunpack.c.l.b16 %v820
        %v933 = vunpack.c.l.b16 %v821
        %v934 = vunpack.c.l.b16 %v822
        %v935 = vunpack.c.l.b16 %v823
        %v936 = vunpack.c.l.b16 %v824
        %v937 = vunpack.c.l.b16 %v825
        %v938 = vunpack.c.l.b16 %v826
        %v939 = vunpack.c.l.b16 %v827
        %v940 = vunpack.c.l.b16 %v828
        %v941 = vunpack.c.l.b16 %v829
        %v942 = vunpack.c.l.b16 %v830
        %v943 = vunpack.c.l.b16 %v831
        %v944 = vunpack.c.l.b16 %v832
        %v945 = vunpack.c.l.b16 %v833
        %v946 = vunpack.c.l.b16 %v834
        %v947 = vunpack.c.l.b16 %v835
        %v948 = vunpack.c.l.b16 %v836
        %v949 = vunpack.c.l.b16 %v837
        %v950 = vunpack.c.l.b16 %v838
        %v951 = vunpack.c.l.b16 %v839
        %v952 = vunpack.c.l.b16 %v840
        %v953 = vunpack.c.l.b16 %v841
        %v954 = vunpack.c.l.b16 %v842
        %v955 = vunpack.c.l.b16 %v843
        %v956 = vunpack.c.l.b16 %v844
        %v957 = vunpack.c.l.b16 %v845
        %v958 = vpack.c.b16 %v927, %v926
        %v959 = vpack.c.b16 %v929, %v928
        %v960 = vpack.c.b16 %v931, %v930
        %v961 = vpack.c.b16 %v933, %v932
        %v962 = vpack.c.b16 %v935, %v934
        %v963 = vpack.c.b16 %v937, %v936
        %v964 = vpack.c.b16 %v939, %v938
        %v965 = vpack.c.b16 %v941, %v940
        %v966 = vpack.c.b16 %v943, %v942
        %v967 = vpack.c.b16 %v945, %v944
        %v968 = vpack.c.b16 %v947, %v946
        %v969 = vpack.c.b16 %v949, %v948
        %v970 = vpack.c.b16 %v951, %v950
        %v971 = vpack.c.b16 %v953, %v952
        %v972 = vpack.c.b16 %v955, %v954
        %v973 = vpack.c.b16 %v957, %v956
        %990 = vmatpush.bf16.xpose.msra.mxu0 %v965
        %991 = vmatpush.bf16.xpose.msra.mxu0 %v964
        %992 = vmatpush.bf16.xpose.msra.mxu0 %v963
        %993 = vmatpush.bf16.xpose.msra.mxu0 %v962
        %994 = vmatpush.bf16.xpose.msra.mxu0 %v961
        %995 = vmatpush.bf16.xpose.msra.mxu0 %v960
        %996 = vmatpush.bf16.xpose.msra.mxu0 %v959
        %997 = vmatpush.bf16.xpose.msra.mxu0 %v958
        %998 = vmatmul.bf16.gmra.mxu0 %v878
        %v999 = vpop.f32.mrf.mxu0
        %v1000 = vadd.f32 0.0, %v999
        %v1001 = vpop.f32.mrf.mxu0
        %v1002 = vadd.f32 0.0, %v1001
        %1003 = vmatmul.bf16.gmra.mxu0 %v879
        %v1004 = vpop.f32.mrf.mxu0
        %v1005 = vadd.f32 0.0, %v1004
        %v1006 = vpop.f32.mrf.mxu0
        %v1007 = vadd.f32 0.0, %v1006
        %1008 = vmatmul.bf16.gmra.mxu0 %v880
        %v1009 = vpop.f32.mrf.mxu0
        %v1010 = vadd.f32 0.0, %v1009
        %v1011 = vpop.f32.mrf.mxu0
        %v1012 = vadd.f32 0.0, %v1011
        %1013 = vmatmul.bf16.gmra.mxu0 %v881
        %v1014 = vpop.f32.mrf.mxu0
        %v1015 = vadd.f32 0.0, %v1014
        %v1016 = vpop.f32.mrf.mxu0
        %v1017 = vadd.f32 0.0, %v1016
        %1018 = vmatmul.bf16.gmra.mxu0 %v882
        %v1019 = vpop.f32.mrf.mxu0
        %v1020 = vadd.f32 0.0, %v1019
        %v1021 = vpop.f32.mrf.mxu0
        %v1022 = vadd.f32 0.0, %v1021
        %1023 = vmatmul.bf16.gmra.mxu0 %v883
        %v1024 = vpop.f32.mrf.mxu0
        %v1025 = vadd.f32 0.0, %v1024
        %v1026 = vpop.f32.mrf.mxu0
        %v1027 = vadd.f32 0.0, %v1026
        %1028 = vmatmul.bf16.gmra.mxu0 %v884
        %v1029 = vpop.f32.mrf.mxu0
        %v1030 = vadd.f32 0.0, %v1029
        %v1031 = vpop.f32.mrf.mxu0
        %v1032 = vadd.f32 0.0, %v1031
        %1033 = vmatmul.bf16.gmra.mxu0 %v885
        %v1034 = vpop.f32.mrf.mxu0
        %v1035 = vadd.f32 0.0, %v1034
        %v1036 = vpop.f32.mrf.mxu0
        %v1037 = vadd.f32 0.0, %v1036
        %1038 = vdwg.mxu0
        %1039 = vmatpush.bf16.xpose.msra.mxu0 %v973
        %1040 = vmatpush.bf16.xpose.msra.mxu0 %v972
        %1041 = vmatpush.bf16.xpose.msra.mxu0 %v971
        %1042 = vmatpush.bf16.xpose.msra.mxu0 %v970
        %1043 = vmatpush.bf16.xpose.msra.mxu0 %v969
        %1044 = vmatpush.bf16.xpose.msra.mxu0 %v968
        %1045 = vmatpush.bf16.xpose.msra.mxu0 %v967
        %1046 = vmatpush.bf16.xpose.msra.mxu0 %v966
        %1047 = vmatmul.bf16.gmra.mxu0 %v878
        %v1048 = vpop.f32.mrf.mxu0
        %v1049 = vadd.f32 0.0, %v1048
        %v1050 = vpop.f32.mrf.mxu0
        %v1051 = vadd.f32 0.0, %v1050
        %1052 = vmatmul.bf16.gmra.mxu0 %v879
        %v1053 = vpop.f32.mrf.mxu0
        %v1054 = vadd.f32 0.0, %v1053
        %v1055 = vpop.f32.mrf.mxu0
        %v1056 = vadd.f32 0.0, %v1055
        %1057 = vmatmul.bf16.gmra.mxu0 %v880
        %v1058 = vpop.f32.mrf.mxu0
        %v1059 = vadd.f32 0.0, %v1058
        %v1060 = vpop.f32.mrf.mxu0
        %v1061 = vadd.f32 0.0, %v1060
        %1062 = vmatmul.bf16.gmra.mxu0 %v881
        %v1063 = vpop.f32.mrf.mxu0
        %v1064 = vadd.f32 0.0, %v1063
        %v1065 = vpop.f32.mrf.mxu0
        %v1066 = vadd.f32 0.0, %v1065
        %1067 = vmatmul.bf16.gmra.mxu0 %v882
        %v1068 = vpop.f32.mrf.mxu0
        %v1069 = vadd.f32 0.0, %v1068
        %v1070 = vpop.f32.mrf.mxu0
        %v1071 = vadd.f32 0.0, %v1070
        %1072 = vmatmul.bf16.gmra.mxu0 %v883
        %v1073 = vpop.f32.mrf.mxu0
        %v1074 = vadd.f32 0.0, %v1073
        %v1075 = vpop.f32.mrf.mxu0
        %v1076 = vadd.f32 0.0, %v1075
        %1077 = vmatmul.bf16.gmra.mxu0 %v884
        %v1078 = vpop.f32.mrf.mxu0
        %v1079 = vadd.f32 0.0, %v1078
        %v1080 = vpop.f32.mrf.mxu0
        %v1081 = vadd.f32 0.0, %v1080
        %1082 = vmatmul.bf16.gmra.mxu0 %v885
        %v1083 = vpop.f32.mrf.mxu0
        %v1084 = vadd.f32 0.0, %v1083
        %v1085 = vpop.f32.mrf.mxu0
        %v1086 = vadd.f32 0.0, %v1085
        %1087 = vdwg.mxu0
        %v1088 = vmax.f32 %v1000, %v1049
        %1089 = vmax.xlane.f32.xlu0 %v1088
        %v1090 = vpop.xlane.xlu0 %1089
        %v1091 = vmax.f32 %v1002, %v1051
        %1092 = vmax.xlane.f32.xlu0 %v1091
        %v1093 = vpop.xlane.xlu0 %1092
        %v1094 = vmax.f32 %v1005, %v1054
        %1095 = vmax.xlane.f32.xlu0 %v1094
        %v1096 = vpop.xlane.xlu0 %1095
        %v1097 = vmax.f32 %v1007, %v1056
        %1098 = vmax.xlane.f32.xlu0 %v1097
        %v1099 = vpop.xlane.xlu0 %1098
        %v1100 = vmax.f32 %v1010, %v1059
        %1101 = vmax.xlane.f32.xlu0 %v1100
        %v1102 = vpop.xlane.xlu0 %1101
        %v1103 = vmax.f32 %v1012, %v1061
        %1104 = vmax.xlane.f32.xlu0 %v1103
        %v1105 = vpop.xlane.xlu0 %1104
        %v1106 = vmax.f32 %v1015, %v1064
        %1107 = vmax.xlane.f32.xlu0 %v1106
        %v1108 = vpop.xlane.xlu0 %1107
        %v1109 = vmax.f32 %v1017, %v1066
        %1110 = vmax.xlane.f32.xlu0 %v1109
        %v1111 = vpop.xlane.xlu0 %1110
        %v1112 = vmax.f32 %v1020, %v1069
        %1113 = vmax.xlane.f32.xlu0 %v1112
        %v1114 = vpop.xlane.xlu0 %1113
        %v1115 = vmax.f32 %v1022, %v1071
        %1116 = vmax.xlane.f32.xlu0 %v1115
        %v1117 = vpop.xlane.xlu0 %1116
        %v1118 = vmax.f32 %v1025, %v1074
        %1119 = vmax.xlane.f32.xlu0 %v1118
        %v1120 = vpop.xlane.xlu0 %1119
        %v1121 = vmax.f32 %v1027, %v1076
        %1122 = vmax.xlane.f32.xlu0 %v1121
        %v1123 = vpop.xlane.xlu0 %1122
        %v1124 = vmax.f32 %v1030, %v1079
        %1125 = vmax.xlane.f32.xlu0 %v1124
        %v1126 = vpop.xlane.xlu0 %1125
        %v1127 = vmax.f32 %v1032, %v1081
        %1128 = vmax.xlane.f32.xlu0 %v1127
        %v1129 = vpop.xlane.xlu0 %1128
        %v1130 = vmax.f32 %v1035, %v1084
        %1131 = vmax.xlane.f32.xlu0 %v1130
        %v1132 = vpop.xlane.xlu0 %1131
        %v1133 = vmax.f32 %v1037, %v1086
        %1134 = vmax.xlane.f32.xlu0 %v1133
        %v1135 = vpop.xlane.xlu0 %1134
        %v1136 = vsub.f32 %v1000, %v1090
        %v1137 = vsub.f32 %v1049, %v1090
        %v1138 = vsub.f32 %v1002, %v1093
        %v1139 = vsub.f32 %v1051, %v1093
        %v1140 = vsub.f32 %v1005, %v1096
        %v1141 = vsub.f32 %v1054, %v1096
        %v1142 = vsub.f32 %v1007, %v1099
        %v1143 = vsub.f32 %v1056, %v1099
        %v1144 = vsub.f32 %v1010, %v1102
        %v1145 = vsub.f32 %v1059, %v1102
        %v1146 = vsub.f32 %v1012, %v1105
        %v1147 = vsub.f32 %v1061, %v1105
        %v1148 = vsub.f32 %v1015, %v1108
        %v1149 = vsub.f32 %v1064, %v1108
        %v1150 = vsub.f32 %v1017, %v1111
        %v1151 = vsub.f32 %v1066, %v1111
        %v1152 = vsub.f32 %v1020, %v1114
        %v1153 = vsub.f32 %v1069, %v1114
        %v1154 = vsub.f32 %v1022, %v1117
        %v1155 = vsub.f32 %v1071, %v1117
        %v1156 = vsub.f32 %v1025, %v1120
        %v1157 = vsub.f32 %v1074, %v1120
        %v1158 = vsub.f32 %v1027, %v1123
        %v1159 = vsub.f32 %v1076, %v1123
        %v1160 = vsub.f32 %v1030, %v1126
        %v1161 = vsub.f32 %v1079, %v1126
        %v1162 = vsub.f32 %v1032, %v1129
        %v1163 = vsub.f32 %v1081, %v1129
        %v1164 = vsub.f32 %v1035, %v1132
        %v1165 = vsub.f32 %v1084, %v1132
        %v1166 = vsub.f32 %v1037, %v1135
        %v1167 = vsub.f32 %v1086, %v1135
        %v1168 = vmul.f32 %v1136, 1.442695
        %v1169 = vpow.pop %v1168
        %v1170 = vmul.f32 %v1137, 1.442695
        %v1171 = vpow.pop %v1170
        %v1172 = vmul.f32 %v1138, 1.442695
        %v1173 = vpow.pop %v1172
        %v1174 = vmul.f32 %v1139, 1.442695
        %v1175 = vpow.pop %v1174
        %v1176 = vmul.f32 %v1140, 1.442695
        %v1177 = vpow.pop %v1176
        %v1178 = vmul.f32 %v1141, 1.442695
        %v1179 = vpow.pop %v1178
        %v1180 = vmul.f32 %v1142, 1.442695
        %v1181 = vpow.pop %v1180
        %v1182 = vmul.f32 %v1143, 1.442695
        %v1183 = vpow.pop %v1182
        %v1184 = vmul.f32 %v1144, 1.442695
        %v1185 = vpow.pop %v1184
        %v1186 = vmul.f32 %v1145, 1.442695
        %v1187 = vpow.pop %v1186
        %v1188 = vmul.f32 %v1146, 1.442695
        %v1189 = vpow.pop %v1188
        %v1190 = vmul.f32 %v1147, 1.442695
        %v1191 = vpow.pop %v1190
        %v1192 = vmul.f32 %v1148, 1.442695
        %v1193 = vpow.pop %v1192
        %v1194 = vmul.f32 %v1149, 1.442695
        %v1195 = vpow.pop %v1194
        %v1196 = vmul.f32 %v1150, 1.442695
        %v1197 = vpow.pop %v1196
        %v1198 = vmul.f32 %v1151, 1.442695
        %v1199 = vpow.pop %v1198
        %v1200 = vmul.f32 %v1152, 1.442695
        %v1201 = vpow.pop %v1200
        %v1202 = vmul.f32 %v1153, 1.442695
        %v1203 = vpow.pop %v1202
        %v1204 = vmul.f32 %v1154, 1.442695
        %v1205 = vpow.pop %v1204
        %v1206 = vmul.f32 %v1155, 1.442695
        %v1207 = vpow.pop %v1206
        %v1208 = vmul.f32 %v1156, 1.442695
        %v1209 = vpow.pop %v1208
        %v1210 = vmul.f32 %v1157, 1.442695
        %v1211 = vpow.pop %v1210
        %v1212 = vmul.f32 %v1158, 1.442695
        %v1213 = vpow.pop %v1212
        %v1214 = vmul.f32 %v1159, 1.442695
        %v1215 = vpow.pop %v1214
        %v1216 = vmul.f32 %v1160, 1.442695
        %v1217 = vpow.pop %v1216
        %v1218 = vmul.f32 %v1161, 1.442695
        %v1219 = vpow.pop %v1218
        %v1220 = vmul.f32 %v1162, 1.442695
        %v1221 = vpow.pop %v1220
        %v1222 = vmul.f32 %v1163, 1.442695
        %v1223 = vpow.pop %v1222
        %v1224 = vmul.f32 %v1164, 1.442695
        %v1225 = vpow.pop %v1224
        %v1226 = vmul.f32 %v1165, 1.442695
        %v1227 = vpow.pop %v1226
        %v1228 = vmul.f32 %v1166, 1.442695
        %v1229 = vpow.pop %v1228
        %v1230 = vmul.f32 %v1167, 1.442695
        %v1231 = vpow.pop %v1230
        %v1232 = vadd.f32 %v1169, %v1171
        %1233 = vadd.xlane.f32.xlu0 %v1232
        %v1234 = vpop.xlane.xlu0 %1233
        %v1235 = vadd.f32 %v1173, %v1175
        %1236 = vadd.xlane.f32.xlu0 %v1235
        %v1237 = vpop.xlane.xlu0 %1236
        %v1238 = vadd.f32 %v1177, %v1179
        %1239 = vadd.xlane.f32.xlu0 %v1238
        %v1240 = vpop.xlane.xlu0 %1239
        %v1241 = vadd.f32 %v1181, %v1183
        %1242 = vadd.xlane.f32.xlu0 %v1241
        %v1243 = vpop.xlane.xlu0 %1242
        %v1244 = vadd.f32 %v1185, %v1187
        %1245 = vadd.xlane.f32.xlu0 %v1244
        %v1246 = vpop.xlane.xlu0 %1245
        %v1247 = vadd.f32 %v1189, %v1191
        %1248 = vadd.xlane.f32.xlu0 %v1247
        %v1249 = vpop.xlane.xlu0 %1248
        %v1250 = vadd.f32 %v1193, %v1195
        %1251 = vadd.xlane.f32.xlu0 %v1250
        %v1252 = vpop.xlane.xlu0 %1251
        %v1253 = vadd.f32 %v1197, %v1199
        %1254 = vadd.xlane.f32.xlu0 %v1253
        %v1255 = vpop.xlane.xlu0 %1254
        %v1256 = vadd.f32 %v1201, %v1203
        %1257 = vadd.xlane.f32.xlu0 %v1256
        %v1258 = vpop.xlane.xlu0 %1257
        %v1259 = vadd.f32 %v1205, %v1207
        %1260 = vadd.xlane.f32.xlu0 %v1259
        %v1261 = vpop.xlane.xlu0 %1260
        %v1262 = vadd.f32 %v1209, %v1211
        %1263 = vadd.xlane.f32.xlu0 %v1262
        %v1264 = vpop.xlane.xlu0 %1263
        %v1265 = vadd.f32 %v1213, %v1215
        %1266 = vadd.xlane.f32.xlu0 %v1265
        %v1267 = vpop.xlane.xlu0 %1266
        %v1268 = vadd.f32 %v1217, %v1219
        %1269 = vadd.xlane.f32.xlu0 %v1268
        %v1270 = vpop.xlane.xlu0 %1269
        %v1271 = vadd.f32 %v1221, %v1223
        %1272 = vadd.xlane.f32.xlu0 %v1271
        %v1273 = vpop.xlane.xlu0 %1272
        %v1274 = vadd.f32 %v1225, %v1227
        %1275 = vadd.xlane.f32.xlu0 %v1274
        %v1276 = vpop.xlane.xlu0 %1275
        %v1277 = vadd.f32 %v1229, %v1231
        %1278 = vadd.xlane.f32.xlu0 %v1277
        %v1279 = vpop.xlane.xlu0 %1278
        %v1280 = vpack.c.bf16 %v1173, %v1169
        %v1281 = vpack.c.bf16 %v1175, %v1171
        %v1282 = vpack.c.bf16 %v1181, %v1177
        %v1283 = vpack.c.bf16 %v1183, %v1179
        %v1284 = vpack.c.bf16 %v1189, %v1185
        %v1285 = vpack.c.bf16 %v1191, %v1187
        %v1286 = vpack.c.bf16 %v1197, %v1193
        %v1287 = vpack.c.bf16 %v1199, %v1195
        %v1288 = vpack.c.bf16 %v1205, %v1201
        %v1289 = vpack.c.bf16 %v1207, %v1203
        %v1290 = vpack.c.bf16 %v1213, %v1209
        %v1291 = vpack.c.bf16 %v1215, %v1211
        %v1292 = vpack.c.bf16 %v1221, %v1217
        %v1293 = vpack.c.bf16 %v1223, %v1219
        %v1294 = vpack.c.bf16 %v1229, %v1225
        %v1295 = vpack.c.bf16 %v1231, %v1227
        %v1296 = vld [vmem:[#allocation4] sm:$0xf]
        %v1297 = vld [vmem:[#allocation4 + $0x4] sm:$0xf]
        %v1298 = vld [vmem:[#allocation4 + $0x8] sm:$0xf]
        %v1299 = vld [vmem:[#allocation4 + $0xc] sm:$0xf]
        %v1300 = vld [vmem:[#allocation4 + $0x10] sm:$0xf]
        %v1301 = vld [vmem:[#allocation4 + $0x14] sm:$0xf]
        %v1302 = vld [vmem:[#allocation4 + $0x18] sm:$0xf]
        %v1303 = vld [vmem:[#allocation4 + $0x1c] sm:$0xf]
        %v1304 = vld [vmem:[#allocation4 + $0x20] sm:$0xf]
        %v1305 = vld [vmem:[#allocation4 + $0x24] sm:$0xf]
        %v1306 = vld [vmem:[#allocation4 + $0x28] sm:$0xf]
        %v1307 = vld [vmem:[#allocation4 + $0x2c] sm:$0xf]
        %v1308 = vld [vmem:[#allocation4 + $0x30] sm:$0xf]
        %v1309 = vld [vmem:[#allocation4 + $0x34] sm:$0xf]
        %v1310 = vld [vmem:[#allocation4 + $0x38] sm:$0xf]
        %v1311 = vld [vmem:[#allocation4 + $0x3c] sm:$0xf]
        %v1312 = vld [vmem:[#allocation4 + $0x40] sm:$0xf]
        %v1313 = vld [vmem:[#allocation4 + $0x44] sm:$0xf]
        %v1314 = vld [vmem:[#allocation4 + $0x48] sm:$0xf]
        %v1315 = vld [vmem:[#allocation4 + $0x4c] sm:$0xf]
        %v1316 = vld [vmem:[#allocation4 + $0x50] sm:$0xf]
        %v1317 = vld [vmem:[#allocation4 + $0x54] sm:$0xf]
        %v1318 = vld [vmem:[#allocation4 + $0x58] sm:$0xf]
        %v1319 = vld [vmem:[#allocation4 + $0x5c] sm:$0xf]
        %v1320 = vld [vmem:[#allocation4 + $0x60] sm:$0xf]
        %v1321 = vld [vmem:[#allocation4 + $0x64] sm:$0xf]
        %v1322 = vld [vmem:[#allocation4 + $0x68] sm:$0xf]
        %v1323 = vld [vmem:[#allocation4 + $0x6c] sm:$0xf]
        %v1324 = vld [vmem:[#allocation4 + $0x70] sm:$0xf]
        %v1325 = vld [vmem:[#allocation4 + $0x74] sm:$0xf]
        %v1326 = vld [vmem:[#allocation4 + $0x78] sm:$0xf]
        %v1327 = vld [vmem:[#allocation4 + $0x7c] sm:$0xf]
        %v1360 = vunpack.c.l.b16 %v1296
        %v1361 = vunpack.c.l.b16 %v1297
        %v1362 = vunpack.c.l.b16 %v1298
        %v1363 = vunpack.c.l.b16 %v1299
        %v1364 = vunpack.c.l.b16 %v1300
        %v1365 = vunpack.c.l.b16 %v1301
        %v1366 = vunpack.c.l.b16 %v1302
        %v1367 = vunpack.c.l.b16 %v1303
        %v1368 = vunpack.c.l.b16 %v1304
        %v1369 = vunpack.c.l.b16 %v1305
        %v1370 = vunpack.c.l.b16 %v1306
        %v1371 = vunpack.c.l.b16 %v1307
        %v1372 = vunpack.c.l.b16 %v1308
        %v1373 = vunpack.c.l.b16 %v1309
        %v1374 = vunpack.c.l.b16 %v1310
        %v1375 = vunpack.c.l.b16 %v1311
        %v1376 = vunpack.c.l.b16 %v1312
        %v1377 = vunpack.c.l.b16 %v1313
        %v1378 = vunpack.c.l.b16 %v1314
        %v1379 = vunpack.c.l.b16 %v1315
        %v1380 = vunpack.c.l.b16 %v1316
        %v1381 = vunpack.c.l.b16 %v1317
        %v1382 = vunpack.c.l.b16 %v1318
        %v1383 = vunpack.c.l.b16 %v1319
        %v1384 = vunpack.c.l.b16 %v1320
        %v1385 = vunpack.c.l.b16 %v1321
        %v1386 = vunpack.c.l.b16 %v1322
        %v1387 = vunpack.c.l.b16 %v1323
        %v1388 = vunpack.c.l.b16 %v1324
        %v1389 = vunpack.c.l.b16 %v1325
        %v1390 = vunpack.c.l.b16 %v1326
        %v1391 = vunpack.c.l.b16 %v1327
        %v1392 = vpack.c.b16 %v1361, %v1360
        %v1393 = vpack.c.b16 %v1363, %v1362
        %v1394 = vpack.c.b16 %v1365, %v1364
        %v1395 = vpack.c.b16 %v1367, %v1366
        %v1396 = vpack.c.b16 %v1369, %v1368
        %v1397 = vpack.c.b16 %v1371, %v1370
        %v1398 = vpack.c.b16 %v1373, %v1372
        %v1399 = vpack.c.b16 %v1375, %v1374
        %v1400 = vpack.c.b16 %v1377, %v1376
        %v1401 = vpack.c.b16 %v1379, %v1378
        %v1402 = vpack.c.b16 %v1381, %v1380
        %v1403 = vpack.c.b16 %v1383, %v1382
        %v1404 = vpack.c.b16 %v1385, %v1384
        %v1405 = vpack.c.b16 %v1387, %v1386
        %v1406 = vpack.c.b16 %v1389, %v1388
        %v1407 = vpack.c.b16 %v1391, %v1390
        %1424 = vmatpush.bf16.msra.mxu0 %v1399
        %1425 = vmatpush.bf16.msra.mxu0 %v1398
        %1426 = vmatpush.bf16.msra.mxu0 %v1397
        %1427 = vmatpush.bf16.msra.mxu0 %v1396
        %1428 = vmatpush.bf16.msra.mxu0 %v1395
        %1429 = vmatpush.bf16.msra.mxu0 %v1394
        %1430 = vmatpush.bf16.msra.mxu0 %v1393
        %1431 = vmatpush.bf16.msra.mxu0 %v1392
        %1432 = vmatmul.bf16.gmra.mxu0 %v1280
        %v1433 = vpop.f32.mrf.mxu0
        %v1434 = vadd.f32 0.0, %v1433
        %v1435 = vpop.f32.mrf.mxu0
        %v1436 = vadd.f32 0.0, %v1435
        %1437 = vmatmul.bf16.gmra.mxu0 %v1282
        %v1438 = vpop.f32.mrf.mxu0
        %v1439 = vadd.f32 0.0, %v1438
        %v1440 = vpop.f32.mrf.mxu0
        %v1441 = vadd.f32 0.0, %v1440
        %1442 = vmatmul.bf16.gmra.mxu0 %v1284
        %v1443 = vpop.f32.mrf.mxu0
        %v1444 = vadd.f32 0.0, %v1443
        %v1445 = vpop.f32.mrf.mxu0
        %v1446 = vadd.f32 0.0, %v1445
        %1447 = vmatmul.bf16.gmra.mxu0 %v1286
        %v1448 = vpop.f32.mrf.mxu0
        %v1449 = vadd.f32 0.0, %v1448
        %v1450 = vpop.f32.mrf.mxu0
        %v1451 = vadd.f32 0.0, %v1450
        %1452 = vmatmul.bf16.gmra.mxu0 %v1288
        %v1453 = vpop.f32.mrf.mxu0
        %v1454 = vadd.f32 0.0, %v1453
        %v1455 = vpop.f32.mrf.mxu0
        %v1456 = vadd.f32 0.0, %v1455
        %1457 = vmatmul.bf16.gmra.mxu0 %v1290
        %v1458 = vpop.f32.mrf.mxu0
        %v1459 = vadd.f32 0.0, %v1458
        %v1460 = vpop.f32.mrf.mxu0
        %v1461 = vadd.f32 0.0, %v1460
        %1462 = vmatmul.bf16.gmra.mxu0 %v1292
        %v1463 = vpop.f32.mrf.mxu0
        %v1464 = vadd.f32 0.0, %v1463
        %v1465 = vpop.f32.mrf.mxu0
        %v1466 = vadd.f32 0.0, %v1465
        %1467 = vmatmul.bf16.gmra.mxu0 %v1294
        %v1468 = vpop.f32.mrf.mxu0
        %v1469 = vadd.f32 0.0, %v1468
        %v1470 = vpop.f32.mrf.mxu0
        %v1471 = vadd.f32 0.0, %v1470
        %1472 = vdwg.mxu0
        %1473 = vmatpush.bf16.msra.mxu0 %v1407
        %1474 = vmatpush.bf16.msra.mxu0 %v1406
        %1475 = vmatpush.bf16.msra.mxu0 %v1405
        %1476 = vmatpush.bf16.msra.mxu0 %v1404
        %1477 = vmatpush.bf16.msra.mxu0 %v1403
        %1478 = vmatpush.bf16.msra.mxu0 %v1402
        %1479 = vmatpush.bf16.msra.mxu0 %v1401
        %1480 = vmatpush.bf16.msra.mxu0 %v1400
        %1481 = vmatmul.bf16.gmra.mxu0 %v1281
        %v1482 = vpop.f32.mrf.mxu0
        %v1483 = vadd.f32 %v1434, %v1482
        %v1484 = vpop.f32.mrf.mxu0
        %v1485 = vadd.f32 %v1436, %v1484
        %1486 = vmatmul.bf16.gmra.mxu0 %v1283
        %v1487 = vpop.f32.mrf.mxu0
        %v1488 = vadd.f32 %v1439, %v1487
        %v1489 = vpop.f32.mrf.mxu0
        %v1490 = vadd.f32 %v1441, %v1489
        %1491 = vmatmul.bf16.gmra.mxu0 %v1285
        %v1492 = vpop.f32.mrf.mxu0
        %v1493 = vadd.f32 %v1444, %v1492
        %v1494 = vpop.f32.mrf.mxu0
        %v1495 = vadd.f32 %v1446, %v1494
        %1496 = vmatmul.bf16.gmra.mxu0 %v1287
        %v1497 = vpop.f32.mrf.mxu0
        %v1498 = vadd.f32 %v1449, %v1497
        %v1499 = vpop.f32.mrf.mxu0
        %v1500 = vadd.f32 %v1451, %v1499
        %1501 = vmatmul.bf16.gmra.mxu0 %v1289
        %v1502 = vpop.f32.mrf.mxu0
        %v1503 = vadd.f32 %v1454, %v1502
        %v1504 = vpop.f32.mrf.mxu0
        %v1505 = vadd.f32 %v1456, %v1504
        %1506 = vmatmul.bf16.gmra.mxu0 %v1291
        %v1507 = vpop.f32.mrf.mxu0
        %v1508 = vadd.f32 %v1459, %v1507
        %v1509 = vpop.f32.mrf.mxu0
        %v1510 = vadd.f32 %v1461, %v1509
        %1511 = vmatmul.bf16.gmra.mxu0 %v1293
        %v1512 = vpop.f32.mrf.mxu0
        %v1513 = vadd.f32 %v1464, %v1512
        %v1514 = vpop.f32.mrf.mxu0
        %v1515 = vadd.f32 %v1466, %v1514
        %1516 = vmatmul.bf16.gmra.mxu0 %v1295
        %v1517 = vpop.f32.mrf.mxu0
        %v1518 = vadd.f32 %v1469, %v1517
        %v1519 = vpop.f32.mrf.mxu0
        %v1520 = vadd.f32 %v1471, %v1519
        %1521 = vdwg.mxu0
        %v1522 = vrcp.pop %v1234
        %v1523 = vrcp.pop %v1237
        %v1524 = vrcp.pop %v1240
        %v1525 = vrcp.pop %v1243
        %v1526 = vrcp.pop %v1246
        %v1527 = vrcp.pop %v1249
        %v1528 = vrcp.pop %v1252
        %v1529 = vrcp.pop %v1255
        %v1530 = vrcp.pop %v1258
        %v1531 = vrcp.pop %v1261
        %v1532 = vrcp.pop %v1264
        %v1533 = vrcp.pop %v1267
        %v1534 = vrcp.pop %v1270
        %v1535 = vrcp.pop %v1273
        %v1536 = vrcp.pop %v1276
        %v1537 = vrcp.pop %v1279
        %v1538 = vmul.f32 %v1483, %v1522
        %v1539 = vmul.f32 %v1485, %v1523
        %v1540 = vmul.f32 %v1488, %v1524
        %v1541 = vmul.f32 %v1490, %v1525
        %v1542 = vmul.f32 %v1493, %v1526
        %v1543 = vmul.f32 %v1495, %v1527
        %v1544 = vmul.f32 %v1498, %v1528
        %v1545 = vmul.f32 %v1500, %v1529
        %v1546 = vmul.f32 %v1503, %v1530
        %v1547 = vmul.f32 %v1505, %v1531
        %v1548 = vmul.f32 %v1508, %v1532
        %v1549 = vmul.f32 %v1510, %v1533
        %v1550 = vmul.f32 %v1513, %v1534
        %v1551 = vmul.f32 %v1515, %v1535
        %v1552 = vmul.f32 %v1518, %v1536
        %v1553 = vmul.f32 %v1520, %v1537
        %1554 = vst [vmem:[%s177] sm:$0xff] %v1538
        %1555 = vst [vmem:[%s177 + $0x8] sm:$0xff] %v1539
        %1556 = vst [vmem:[%s177 + $0x10] sm:$0xff] %v1540
        %1557 = vst [vmem:[%s177 + $0x18] sm:$0xff] %v1541
        %1558 = vst [vmem:[%s177 + $0x20] sm:$0xff] %v1542
        %1559 = vst [vmem:[%s177 + $0x28] sm:$0xff] %v1543
        %1560 = vst [vmem:[%s177 + $0x30] sm:$0xff] %v1544
        %1561 = vst [vmem:[%s177 + $0x38] sm:$0xff] %v1545
        %1562 = vst [vmem:[%s177 + $0x40] sm:$0xff] %v1546
        %1563 = vst [vmem:[%s177 + $0x48] sm:$0xff] %v1547
        %1564 = vst [vmem:[%s177 + $0x50] sm:$0xff] %v1548
        %1565 = vst [vmem:[%s177 + $0x58] sm:$0xff] %v1549
        %1566 = vst [vmem:[%s177 + $0x60] sm:$0xff] %v1550
        %1567 = vst [vmem:[%s177 + $0x68] sm:$0xff] %v1551
        %1568 = vst [vmem:[%s177 + $0x70] sm:$0xff] %v1552
        %1569 = vst [vmem:[%s177 + $0x78] sm:$0xff] %v1553
        %s1570 = sand.u32 %s107, 1
        %s1571 = scalar_lea.sflag [#allocation6], %s1570
        %s1572 = sand.u32 %s107, 1
        %s1573 = smul.addr %s1572, 128
        %s1574 = scalar_lea.vmem [#allocation5], %s1573
        // Predicated region
        $region37: #{tpu_custom_call.1} parent=31 // pred_check
          %p1575 = pneg %p117
        $region38: #{tpu_custom_call.1} parent=31 // pred_check_branch
          %1577 = sbr.rel (%p1575) target = $region40
        $region39: #{tpu_custom_call.1} parent=31 // pred_region
          %s1578 = smul.u32 16, %s22
          %1580 = vsyncadd %s1571, 0
          %s1581 = smul.addr %s21, 32
          %s1582 = sadd.s32 %s1578, %s1581
          %s1583 = smul.addr %s1582, 8
          %s1584 = scalar_lea.hbm %s3, %s1583
          %s1585 = sshll.u32 %s1574, 4
          %s1586 = int_to_ptr.vmem [resolvable:$true] %s1585
          %s1587 = sshll.u32 %s1584, 4
          %s1588 = int_to_ptr.hbm [resolvable:$true] %s1587
          %1593 = dma.vmem_to_hbm [thread:$0]  %s1586, 2048, %s1588, %s1571, 128, 128, 8
        $region40: #{tpu_custom_call.1} parent=31 // pred_fallthru
          _
      $region32: #{tpu_custom_call.1} parent=5 // pred_fallthru
        _
      %p1594 = scmp.le.s32.totalorder 2, %s12
      // Predicated region
      $region41: #{tpu_custom_call.1} parent=5 // pred_check
        %p1595 = pneg %p1594
      $region42: #{tpu_custom_call.1} parent=5 // pred_check_branch
        %1597 = sbr.rel (%p1595) target = $region44
      $region43: #{tpu_custom_call.1} parent=5 // pred_region
        %s1598 = ssub.s32 %s12, 2
        // Predicated region
        $region45: #{tpu_custom_call.1} parent=43 // pred_check
          %p1599 = pneg %p123
        $region46: #{tpu_custom_call.1} parent=43 // pred_check_branch
          %1601 = sbr.rel (%p1599) target = $region48
        $region47: #{tpu_custom_call.1} parent=43 // pred_region
          %s1602 = sand.u32 %s108, 1
          %s1603 = scalar_lea.sflag [#allocation6], %s1602
          %s1604 = sand.u32 %s108, 1
          %s1605 = smul.addr %s1604, 128
          %s1606 = scalar_lea.vmem [#allocation5], %s1605
          %1608 = dma.done %s1603, 2048
        $region48: #{tpu_custom_call.1} parent=43 // pred_fallthru
          _
      $region44: #{tpu_custom_call.1} parent=5 // pred_fallthru
        _
    $region6: #{tpu_custom_call.1} parent=1 // loop_footer
      %s16 = sadd.s32 1, %s12
    $region7: #{tpu_custom_call.1} parent=1 // loop_footer_branch
      %11 = sbr.rel target = $region3
    $region8: #{tpu_custom_call.1} parent=1 // loop_exit
      _
    %1609 = vsyncpa [#allocation6], 1
    %s1610 = scalar_lea.sflag [#allocation6], 1
    %1611 = vsyncpa %s1610, 1

</llo_original>
